<compile_context>
chip_gen: v6e
topology: v6e:2x2x1
jax: 0.10.0
libtpu: 0.0.40
codegen_flags: <defaults>
</compile_context>

<pallas_src>
import numpy as np
import jax
import jax.numpy as jnp
from jax.experimental import pallas as pl
from jax.experimental.pallas import tpu as pltpu

# ----------------------------- configuration ---------------------------------
N_NODES = 8          # nodes per graph
IN_CH   = 32         # in_channels (== HEADS*OUT_CH so the residual add is valid)
OUT_CH  = 4          # out_channels per head
HEADS   = 8
FF_DIM  = 128        # ff_hidden_dim
D       = OUT_CH * HEADS          # 32 (concat=True)
HN      = HEADS * N_NODES         # 64, flattened (head, source) axis
EPS     = 1e-5                    # LayerNorm eps (PyTorch default)
NEG_SLOPE = 0.2                   # GATConv LeakyReLU negative slope (default)


def _layernorm(v, gamma, beta):
    mu = jnp.mean(v, axis=-1, keepdims=True)
    var = jnp.mean((v - mu) ** 2, axis=-1, keepdims=True)
    return (v - mu) * jax.lax.rsqrt(var + EPS) * gamma + beta


# ------------------------------- Pallas kernel --------------------------------
def gat_tf_layer_kernel(x_ref, bias_ref, w_all_ref, eh2f_ref, ef2h_ref,
                        pdiag_ref, prep_ref, vmask_ref, bg_ref,
                        w1_ref, b1_ref, w2_ref, b2_ref,
                        g1_ref, be1_ref, g2_ref, be2_ref, out_ref):
    x = x_ref[...]                                           # [N, F]  f32

    # ---- GATConv: fused projection, ONE MXU push (bf16 in / f32 acc) ----
    # columns of w_all: [ Wg | Wg @ att_src | Wg @ att_dst ]
    ha = jnp.dot(x.astype(jnp.bfloat16), w_all_ref[...],
                 preferred_element_type=jnp.float32)         # [N, D + 2H]
    h     = ha[:, :D]                                        # [N, D]  per-head values (concat)
    a_src = ha[:, D:D + HEADS]                               # [N, H]
    a_dst = ha[:, D + HEADS:]                                # [N, H]

    # ---- flat scores for ALL heads:  s[i, h*N + j] = a_dst[i, h] + a_src[j, h] ----
    # 0/1 constant matmuls move the per-source term from sublanes to lanes without any
    # transpose / reshape relayouts.
    eh2f = eh2f_ref[...]                                     # [H, H*N]
    dst_flat = jnp.dot(a_dst, eh2f, preferred_element_type=jnp.float32)      # [N, H*N]
    src_sel  = jnp.dot(a_src, eh2f, preferred_element_type=jnp.float32) * pdiag_ref[...]
    src_row  = jnp.sum(src_sel, axis=0, keepdims=True)       # [1, H*N]
    s = dst_flat + src_row
    s = jnp.where(s > 0, s, NEG_SLOPE * s)                   # LeakyReLU(0.2) before masking
    s = s + bias_ref[...]                                    # additive -1e30 on non-edges (f32)

    # ---- batched masked softmax over sources (per destination, per head) ----
    # The max is taken over the whole row (all heads at once): softmax is invariant to any
    # per-(i, head) constant, and the row max is such a constant, so this is exact.
    m = jnp.max(s, axis=-1, keepdims=True)                   # [N, 1]
    e = jnp.exp(s - m)                                       # [N, H*N]  (masked entries -> 0)
    denom = jnp.dot(e, ef2h_ref[...], preferred_element_type=jnp.float32)    # [N, H]
    inv = pl.reciprocal(denom, approx=True)                  # EUP, off the VPU critical path
    att = e * jnp.dot(inv, eh2f, preferred_element_type=jnp.float32)         # [N, H*N]

    # ---- single block-diagonal aggregation matmul (replaces 8 per-head matmuls + concat) ----
    v_big = (jnp.dot(prep_ref[...], h, preferred_element_type=jnp.float32)
             * vmask_ref[...]).astype(jnp.bfloat16)          # [H*N, D] block-diagonal values
    gat = jnp.dot(att.astype(jnp.bfloat16), v_big,
                  preferred_element_type=jnp.float32) + bg_ref[...]          # [N, D]

    # ---- residual + norm1, FFN, residual + norm2 (dropout = identity in eval mode) ----
    y1 = _layernorm(gat + x, g1_ref[...], be1_ref[...])
    ff = jnp.dot(y1.astype(jnp.bfloat16), w1_ref[...],
                 preferred_element_type=jnp.float32) + b1_ref[...]
    ff = jnp.maximum(ff, 0.0)
    ff = jnp.dot(ff.astype(jnp.bfloat16), w2_ref[...],
                 preferred_element_type=jnp.float32) + b2_ref[...]
    out_ref[...] = _layernorm(ff + y1, g2_ref[...], be2_ref[...])


def gat_transformer_layer(x, bias_flat, params):
    """x: [G, N, IN_CH] f32, bias_flat: [G, N, H*N] f32 (0 / -1e30)."""
    G = x.shape[0]

    def full(shape):                       # parameter shared across the graph grid
        return pl.BlockSpec(shape, lambda g: (0, 0))

    def per_graph(shape):                  # one graph per grid step (leading dim squeezed)
        return pl.BlockSpec((None,) + shape, lambda g: (g, 0, 0))

    in_specs = [
        per_graph((N_NODES, IN_CH)),       # x
        per_graph((N_NODES, HN)),          # bias_flat
        full((IN_CH, D + 2 * HEADS)),      # w_all (bf16)
        full((HEADS, HN)),                 # eh2f
        full((HN, HEADS)),                 # ef2h
        full((N_NODES, HN)),               # pdiag
        full((HN, N_NODES)),               # prep
        full((HN, D)),                     # vmask
        full((1, D)),                      # bg
        full((D, FF_DIM)),                 # w1 (bf16)
        full((1, FF_DIM)),                 # b1
        full((FF_DIM, D)),                 # w2 (bf16)
        full((1, D)),                      # b2
        full((1, D)), full((1, D)),        # g1, be1
        full((1, D)), full((1, D)),        # g2, be2
    ]
    inputs = (x, bias_flat,
              params["w_all"], params["eh2f"], params["ef2h"], params["pdiag"],
              params["prep"], params["vmask"], params["bg"],
              params["w1"], params["b1"], params["w2"], params["b2"],
              params["g1"], params["be1"], params["g2"], params["be2"])

    return pl.pallas_call(
        gat_tf_layer_kernel,
        grid=(G,),
        out_shape=jax.ShapeDtypeStruct((G, N_NODES, D), jnp.float32),
        in_specs=in_specs,
        out_specs=pl.BlockSpec((None, N_NODES, D), lambda g: (g, 0, 0)),
        compiler_params=pltpu.CompilerParams(
            dimension_semantics=("parallel",)),   # independent graphs -> megacore-shardable
    )(*inputs)


# ------------------------------ pure-JAX reference ----------------------------
def reference(x, adj, p):
    """Single-graph reference: same math (bf16 matmul inputs, f32 accumulation)."""
    ha = jnp.dot(x.astype(jnp.bfloat16), p["w_all"], preferred_element_type=jnp.float32)
    h = ha[:, :D]
    a_src = ha[:, D:D + HEADS]
    a_dst = ha[:, D + HEADS:]
    s = a_dst[:, None, :] + a_src[None, :, :]                # [N, N, H], s[i, j, h]
    s = jnp.where(s > 0, s, NEG_SLOPE * s)
    s = jnp.where(adj[:, :, None] > 0, s, -1e30)
    att = jax.nn.softmax(s, axis=1)                          # softmax over sources j
    att_b = att.astype(jnp.bfloat16)
    hh = h.astype(jnp.bfloat16).reshape(N_NODES, HEADS, OUT_CH)
    gat = jnp.einsum("ijh,jhc->ihc", att_b, hh,
                     preferred_element_type=jnp.float32).reshape(N_NODES, D) + p["bg"]
    y1 = _layernorm(gat + x, p["g1"], p["be1"])
    ff = jnp.dot(y1.astype(jnp.bfloat16), p["w1"], preferred_element_type=jnp.float32) + p["b1"]
    ff = jnp.maximum(ff, 0.0)
    ff = jnp.dot(ff.astype(jnp.bfloat16), p["w2"], preferred_element_type=jnp.float32) + p["b2"]
    return _layernorm(ff + y1, p["g2"], p["be2"])


# ----------------------------------- main --------------------------------------
if __name__ == "__main__":
    key = jax.random.PRNGKey(0)
    ks = jax.random.split(key, 10)

    G = 4  # graphs per pallas_call (leading "parallel" grid axis)
    x = jax.random.normal(ks[0], (G, N_NODES, IN_CH), dtype=jnp.float32)

    # deterministic random graphs; densify edge_index -> additive softmax mask on the host
    rng = np.random.RandomState(0)
    adjs = np.zeros((G, N_NODES, N_NODES), np.float32)
    bias_flat = np.zeros((G, N_NODES, HN), np.float32)
    for g in range(G):
        adj = (rng.rand(N_NODES, N_NODES) < 0.35).astype(np.float32)  # adj[dst, src]
        np.fill_diagonal(adj, 1.0)                                    # add_self_loops=True
        adjs[g] = adj
        bias2d = np.where(adj > 0, 0.0, -1e30).astype(np.float32)
        bias_flat[g] = np.tile(bias2d, (1, HEADS))                    # col h*N + j
    adjs = jnp.asarray(adjs)
    bias_flat = jnp.asarray(bias_flat)

    sc = 0.1
    wg = sc * jax.random.normal(ks[1], (IN_CH, D), dtype=jnp.float32)
    att_src = sc * jax.random.normal(ks[2], (HEADS, OUT_CH), dtype=jnp.float32)
    att_dst = sc * jax.random.normal(ks[3], (HEADS, OUT_CH), dtype=jnp.float32)
    # pack att vectors as [D, H]:  A[h*C + c, h] = att[h, c], then fold into Wg (host-side)
    asrc_p = np.zeros((D, HEADS), np.float32)
    adst_p = np.zeros((D, HEADS), np.float32)
    for hd in range(HEADS):
        asrc_p[hd * OUT_CH:(hd + 1) * OUT_CH, hd] = np.asarray(att_src)[hd]
        adst_p[hd * OUT_CH:(hd + 1) * OUT_CH, hd] = np.asarray(att_dst)[hd]
    w_all = jnp.concatenate([wg, wg @ jnp.asarray(asrc_p), wg @ jnp.asarray(adst_p)], axis=1)

    # 0/1 layout constants used by the kernel (see kernel comments)
    eh2f = np.zeros((HEADS, HN), np.float32)        # expand per-head scalar across its N slots
    vmask = np.zeros((HN, D), np.float32)           # block-diagonal head mask for the values
    for hd in range(HEADS):
        eh2f[hd, hd * N_NODES:(hd + 1) * N_NODES] = 1.0
        vmask[hd * N_NODES:(hd + 1) * N_NODES, hd * OUT_CH:(hd + 1) * OUT_CH] = 1.0
    pdiag = np.tile(np.eye(N_NODES, dtype=np.float32), (1, HEADS))    # [N, H*N]

    params = {
        "w_all": w_all.astype(jnp.bfloat16),
        "eh2f":  jnp.asarray(eh2f),
        "ef2h":  jnp.asarray(eh2f.T.copy()),
        "pdiag": jnp.asarray(pdiag),
        "prep":  jnp.asarray(pdiag.T.copy()),
        "vmask": jnp.asarray(vmask),
        "bg":  sc * jax.random.normal(ks[4], (1, D), dtype=jnp.float32),
        "w1": (sc * jax.random.normal(ks[5], (D, FF_DIM), dtype=jnp.float32)).astype(jnp.bfloat16),
        "b1":  sc * jax.random.normal(ks[6], (1, FF_DIM), dtype=jnp.float32),
        "w2": (sc * jax.random.normal(ks[7], (FF_DIM, D), dtype=jnp.float32)).astype(jnp.bfloat16),
        "b2":  sc * jax.random.normal(ks[8], (1, D), dtype=jnp.float32),
        "g1":  jnp.ones((1, D), jnp.float32),
        "be1": jnp.zeros((1, D), jnp.float32),
        "g2":  jnp.ones((1, D), jnp.float32),
        "be2": jnp.zeros((1, D), jnp.float32),
    }

    out = jax.block_until_ready(gat_transformer_layer(x, bias_flat, params))

    # validate every graph against the pure-JAX reference (bf16 matmuls + approx reciprocal
    # in the kernel -> slightly loosened tolerance)
    for g in range(G):
        ref = jax.block_until_ready(reference(x[g], adjs[g], params))
        np.testing.assert_allclose(np.asarray(out[g]), np.asarray(ref), rtol=5e-3, atol=5e-3)

    print("KERNEL_OK")
</pallas_src>

<mosaic_0001>
module attributes {stable_mosaic.version = 11 : i64} {
  func.func @gat_tf_layer_kernel(%arg0: i32, %arg1: memref<1x8x32xf32, #tpu.memory_space<vmem>>, %arg2: memref<1x8x64xf32, #tpu.memory_space<vmem>>, %arg3: memref<32x48xbf16, #tpu.memory_space<vmem>>, %arg4: memref<8x64xf32, #tpu.memory_space<vmem>>, %arg5: memref<64x8xf32, #tpu.memory_space<vmem>>, %arg6: memref<8x64xf32, #tpu.memory_space<vmem>>, %arg7: memref<64x8xf32, #tpu.memory_space<vmem>>, %arg8: memref<64x32xf32, #tpu.memory_space<vmem>>, %arg9: memref<1x32xf32, #tpu.memory_space<vmem>>, %arg10: memref<32x128xbf16, #tpu.memory_space<vmem>>, %arg11: memref<1x128xf32, #tpu.memory_space<vmem>>, %arg12: memref<128x32xbf16, #tpu.memory_space<vmem>>, %arg13: memref<1x32xf32, #tpu.memory_space<vmem>>, %arg14: memref<1x32xf32, #tpu.memory_space<vmem>>, %arg15: memref<1x32xf32, #tpu.memory_space<vmem>>, %arg16: memref<1x32xf32, #tpu.memory_space<vmem>>, %arg17: memref<1x32xf32, #tpu.memory_space<vmem>>, %arg18: memref<1x8x32xf32, #tpu.memory_space<vmem>>) attributes {dimension_semantics = [#tpu.dimension_semantics<parallel>], iteration_bounds = array<i64: 4>, scalar_prefetch = 0 : i64, scratch_operands = 0 : i64, tpu.core_type = #tpu.core_type<tc>, window_params = [{transform_indices = @transform_0, window_bounds = array<i64: 1, 8, 32>}, {transform_indices = @transform_1, window_bounds = array<i64: 1, 8, 64>}, {pipeline_mode = #tpu.pipeline_mode<synchronous>, transform_indices = @transform_2, window_bounds = array<i64: 32, 48>}, {pipeline_mode = #tpu.pipeline_mode<synchronous>, transform_indices = @transform_3, window_bounds = array<i64: 8, 64>}, {pipeline_mode = #tpu.pipeline_mode<synchronous>, transform_indices = @transform_4, window_bounds = array<i64: 64, 8>}, {pipeline_mode = #tpu.pipeline_mode<synchronous>, transform_indices = @transform_5, window_bounds = array<i64: 8, 64>}, {pipeline_mode = #tpu.pipeline_mode<synchronous>, transform_indices = @transform_6, window_bounds = array<i64: 64, 8>}, {pipeline_mode = #tpu.pipeline_mode<synchronous>, transform_indices = @transform_7, window_bounds = array<i64: 64, 32>}, {pipeline_mode = #tpu.pipeline_mode<synchronous>, transform_indices = @transform_8, window_bounds = array<i64: 1, 32>}, {pipeline_mode = #tpu.pipeline_mode<synchronous>, transform_indices = @transform_9, window_bounds = array<i64: 32, 128>}, {pipeline_mode = #tpu.pipeline_mode<synchronous>, transform_indices = @transform_10, window_bounds = array<i64: 1, 128>}, {pipeline_mode = #tpu.pipeline_mode<synchronous>, transform_indices = @transform_11, window_bounds = array<i64: 128, 32>}, {pipeline_mode = #tpu.pipeline_mode<synchronous>, transform_indices = @transform_12, window_bounds = array<i64: 1, 32>}, {pipeline_mode = #tpu.pipeline_mode<synchronous>, transform_indices = @transform_13, window_bounds = array<i64: 1, 32>}, {pipeline_mode = #tpu.pipeline_mode<synchronous>, transform_indices = @transform_14, window_bounds = array<i64: 1, 32>}, {pipeline_mode = #tpu.pipeline_mode<synchronous>, transform_indices = @transform_15, window_bounds = array<i64: 1, 32>}, {pipeline_mode = #tpu.pipeline_mode<synchronous>, transform_indices = @transform_16, window_bounds = array<i64: 1, 32>}, {transform_indices = @transform_17, window_bounds = array<i64: 1, 8, 32>}]} {
    %c0 = arith.constant 0 : index
    %c0_0 = arith.constant 0 : index
    %c0_1 = arith.constant 0 : index
    %0 = vector.load %arg1[%c0, %c0_0, %c0_1] : memref<1x8x32xf32, #tpu.memory_space<vmem>>, vector<1x8x32xf32>
    %1 = vector.shape_cast %0 : vector<1x8x32xf32> to vector<8x32xf32>
    %2 = arith.truncf %1 : vector<8x32xf32> to vector<8x32xbf16>
    %c0_2 = arith.constant 0 : index
    %c0_3 = arith.constant 0 : index
    %3 = vector.load %arg3[%c0_2, %c0_3] : memref<32x48xbf16, #tpu.memory_space<vmem>>, vector<32x48xbf16>
    %cst = arith.constant dense<0.000000e+00> : vector<8x48xf32>
    %4 = tpu.matmul %2, %3, %cst {dimension_numbers = #tpu.dot_dimension_numbers<[1], [0], [0], [1], [0, 0, 1, 1], [], []>} : vector<8x32xbf16>, vector<32x48xbf16>, vector<8x48xf32> -> vector<8x48xf32>
    %5 = vector.extract_strided_slice %4 {offsets = [0, 0], sizes = [8, 32], strides = [1, 1]} : vector<8x48xf32> to vector<8x32xf32>
    %6 = vector.extract_strided_slice %4 {offsets = [0, 32], sizes = [8, 8], strides = [1, 1]} : vector<8x48xf32> to vector<8x8xf32>
    %7 = vector.extract_strided_slice %4 {offsets = [0, 40], sizes = [8, 8], strides = [1, 1]} : vector<8x48xf32> to vector<8x8xf32>
    %c0_4 = arith.constant 0 : index
    %c0_5 = arith.constant 0 : index
    %8 = vector.load %arg4[%c0_4, %c0_5] : memref<8x64xf32, #tpu.memory_space<vmem>>, vector<8x64xf32>
    %cst_6 = arith.constant dense<0.000000e+00> : vector<8x64xf32>
    %9 = tpu.matmul %7, %8, %cst_6 {dimension_numbers = #tpu.dot_dimension_numbers<[1], [0], [0], [1], [0, 0, 1, 1], [], []>} : vector<8x8xf32>, vector<8x64xf32>, vector<8x64xf32> -> vector<8x64xf32>
    %cst_7 = arith.constant dense<0.000000e+00> : vector<8x64xf32>
    %10 = tpu.matmul %6, %8, %cst_7 {dimension_numbers = #tpu.dot_dimension_numbers<[1], [0], [0], [1], [0, 0, 1, 1], [], []>} : vector<8x8xf32>, vector<8x64xf32>, vector<8x64xf32> -> vector<8x64xf32>
    %c0_8 = arith.constant 0 : index
    %c0_9 = arith.constant 0 : index
    %11 = vector.load %arg6[%c0_8, %c0_9] : memref<8x64xf32, #tpu.memory_space<vmem>>, vector<8x64xf32>
    %12 = arith.mulf %10, %11 : vector<8x64xf32>
    %cst_10 = arith.constant dense<0.000000e+00> : vector<64xf32>
    %13 = vector.multi_reduction <add>, %12, %cst_10 [0] : vector<8x64xf32> to vector<64xf32>
    %14 = vector.shape_cast %13 : vector<64xf32> to vector<1x64xf32>
    %15 = vector.broadcast %14 : vector<1x64xf32> to vector<8x64xf32>
    %16 = arith.addf %9, %15 : vector<8x64xf32>
    %cst_11 = arith.constant 0.000000e+00 : f32
    %17 = vector.broadcast %cst_11 : f32 to vector<8x64xf32>
    %18 = arith.cmpf ogt, %16, %17 : vector<8x64xf32>
    %cst_12 = arith.constant 2.000000e-01 : f32
    %19 = vector.broadcast %cst_12 : f32 to vector<8x64xf32>
    %20 = arith.mulf %19, %16 : vector<8x64xf32>
    %21 = arith.select %18, %16, %20 : vector<8x64xi1>, vector<8x64xf32>
    %c0_13 = arith.constant 0 : index
    %c0_14 = arith.constant 0 : index
    %c0_15 = arith.constant 0 : index
    %22 = vector.load %arg2[%c0_13, %c0_14, %c0_15] : memref<1x8x64xf32, #tpu.memory_space<vmem>>, vector<1x8x64xf32>
    %23 = vector.shape_cast %22 : vector<1x8x64xf32> to vector<8x64xf32>
    %24 = arith.addf %21, %23 : vector<8x64xf32>
    %cst_16 = arith.constant dense<0xFF800000> : vector<8xf32>
    %25 = vector.multi_reduction <maximumf>, %24, %cst_16 [1] : vector<8x64xf32> to vector<8xf32>
    %26 = vector.shape_cast %25 : vector<8xf32> to vector<8x1xf32>
    %27 = vector.broadcast %26 : vector<8x1xf32> to vector<8x64xf32>
    %28 = arith.subf %24, %27 : vector<8x64xf32>
    %29 = math.exp %28 : vector<8x64xf32>
    %c0_17 = arith.constant 0 : index
    %c0_18 = arith.constant 0 : index
    %30 = vector.load %arg5[%c0_17, %c0_18] : memref<64x8xf32, #tpu.memory_space<vmem>>, vector<64x8xf32>
    %cst_19 = arith.constant dense<0.000000e+00> : vector<8x8xf32>
    %31 = tpu.matmul %29, %30, %cst_19 {dimension_numbers = #tpu.dot_dimension_numbers<[1], [0], [0], [1], [0, 0, 1, 1], [], []>} : vector<8x64xf32>, vector<64x8xf32>, vector<8x8xf32> -> vector<8x8xf32>
    %32 = tpu.reciprocal %31 {approx = true} : vector<8x8xf32> -> vector<8x8xf32>
    %cst_20 = arith.constant dense<0.000000e+00> : vector<8x64xf32>
    %33 = tpu.matmul %32, %8, %cst_20 {dimension_numbers = #tpu.dot_dimension_numbers<[1], [0], [0], [1], [0, 0, 1, 1], [], []>} : vector<8x8xf32>, vector<8x64xf32>, vector<8x64xf32> -> vector<8x64xf32>
    %34 = arith.mulf %29, %33 : vector<8x64xf32>
    %c0_21 = arith.constant 0 : index
    %c0_22 = arith.constant 0 : index
    %35 = vector.load %arg7[%c0_21, %c0_22] : memref<64x8xf32, #tpu.memory_space<vmem>>, vector<64x8xf32>
    %cst_23 = arith.constant dense<0.000000e+00> : vector<64x32xf32>
    %36 = tpu.matmul %35, %5, %cst_23 {dimension_numbers = #tpu.dot_dimension_numbers<[1], [0], [0], [1], [0, 0, 1, 1], [], []>} : vector<64x8xf32>, vector<8x32xf32>, vector<64x32xf32> -> vector<64x32xf32>
    %c0_24 = arith.constant 0 : index
    %c0_25 = arith.constant 0 : index
    %37 = vector.load %arg8[%c0_24, %c0_25] : memref<64x32xf32, #tpu.memory_space<vmem>>, vector<64x32xf32>
    %38 = arith.mulf %36, %37 : vector<64x32xf32>
    %39 = arith.truncf %38 : vector<64x32xf32> to vector<64x32xbf16>
    %40 = arith.truncf %34 : vector<8x64xf32> to vector<8x64xbf16>
    %cst_26 = arith.constant dense<0.000000e+00> : vector<8x32xf32>
    %41 = tpu.matmul %40, %39, %cst_26 {dimension_numbers = #tpu.dot_dimension_numbers<[1], [0], [0], [1], [0, 0, 1, 1], [], []>} : vector<8x64xbf16>, vector<64x32xbf16>, vector<8x32xf32> -> vector<8x32xf32>
    %c0_27 = arith.constant 0 : index
    %c0_28 = arith.constant 0 : index
    %42 = vector.load %arg9[%c0_27, %c0_28] : memref<1x32xf32, #tpu.memory_space<vmem>>, vector<1x32xf32>
    %43 = vector.broadcast %42 : vector<1x32xf32> to vector<8x32xf32>
    %44 = arith.addf %41, %43 : vector<8x32xf32>
    %45 = arith.addf %44, %1 : vector<8x32xf32>
    %c0_29 = arith.constant 0 : index
    %c0_30 = arith.constant 0 : index
    %46 = vector.load %arg14[%c0_29, %c0_30] : memref<1x32xf32, #tpu.memory_space<vmem>>, vector<1x32xf32>
    %c0_31 = arith.constant 0 : index
    %c0_32 = arith.constant 0 : index
    %47 = vector.load %arg15[%c0_31, %c0_32] : memref<1x32xf32, #tpu.memory_space<vmem>>, vector<1x32xf32>
    %cst_33 = arith.constant dense<0.000000e+00> : vector<8xf32>
    %48 = vector.multi_reduction <add>, %45, %cst_33 [1] : vector<8x32xf32> to vector<8xf32>
    %49 = vector.shape_cast %48 : vector<8xf32> to vector<8x1xf32>
    %cst_34 = arith.constant 3.200000e+01 : f32
    %50 = vector.broadcast %cst_34 : f32 to vector<8x1xf32>
    %51 = arith.divf %49, %50 : vector<8x1xf32>
    %52 = vector.broadcast %51 : vector<8x1xf32> to vector<8x32xf32>
    %53 = arith.subf %45, %52 : vector<8x32xf32>
    %54 = arith.mulf %53, %53 : vector<8x32xf32>
    %cst_35 = arith.constant dense<0.000000e+00> : vector<8xf32>
    %55 = vector.multi_reduction <add>, %54, %cst_35 [1] : vector<8x32xf32> to vector<8xf32>
    %56 = vector.shape_cast %55 : vector<8xf32> to vector<8x1xf32>
    %cst_36 = arith.constant 3.200000e+01 : f32
    %57 = vector.broadcast %cst_36 : f32 to vector<8x1xf32>
    %58 = arith.divf %56, %57 : vector<8x1xf32>
    %59 = vector.broadcast %51 : vector<8x1xf32> to vector<8x32xf32>
    %60 = arith.subf %45, %59 : vector<8x32xf32>
    %cst_37 = arith.constant 9.99999974E-6 : f32
    %61 = vector.broadcast %cst_37 : f32 to vector<8x1xf32>
    %62 = arith.addf %58, %61 : vector<8x1xf32>
    %63 = math.rsqrt %62 : vector<8x1xf32>
    %64 = vector.broadcast %63 : vector<8x1xf32> to vector<8x32xf32>
    %65 = arith.mulf %60, %64 : vector<8x32xf32>
    %66 = vector.broadcast %46 : vector<1x32xf32> to vector<8x32xf32>
    %67 = arith.mulf %65, %66 : vector<8x32xf32>
    %68 = vector.broadcast %47 : vector<1x32xf32> to vector<8x32xf32>
    %69 = arith.addf %67, %68 : vector<8x32xf32>
    %70 = arith.truncf %69 : vector<8x32xf32> to vector<8x32xbf16>
    %c0_38 = arith.constant 0 : index
    %c0_39 = arith.constant 0 : index
    %71 = vector.load %arg10[%c0_38, %c0_39] : memref<32x128xbf16, #tpu.memory_space<vmem>>, vector<32x128xbf16>
    %cst_40 = arith.constant dense<0.000000e+00> : vector<8x128xf32>
    %72 = tpu.matmul %70, %71, %cst_40 {dimension_numbers = #tpu.dot_dimension_numbers<[1], [0], [0], [1], [0, 0, 1, 1], [], []>} : vector<8x32xbf16>, vector<32x128xbf16>, vector<8x128xf32> -> vector<8x128xf32>
    %c0_41 = arith.constant 0 : index
    %c0_42 = arith.constant 0 : index
    %73 = vector.load %arg11[%c0_41, %c0_42] : memref<1x128xf32, #tpu.memory_space<vmem>>, vector<1x128xf32>
    %74 = vector.broadcast %73 : vector<1x128xf32> to vector<8x128xf32>
    %75 = arith.addf %72, %74 : vector<8x128xf32>
    %cst_43 = arith.constant 0.000000e+00 : f32
    %76 = vector.broadcast %cst_43 : f32 to vector<8x128xf32>
    %77 = arith.maximumf %75, %76 : vector<8x128xf32>
    %78 = arith.truncf %77 : vector<8x128xf32> to vector<8x128xbf16>
    %c0_44 = arith.constant 0 : index
    %c0_45 = arith.constant 0 : index
    %79 = vector.load %arg12[%c0_44, %c0_45] : memref<128x32xbf16, #tpu.memory_space<vmem>>, vector<128x32xbf16>
    %cst_46 = arith.constant dense<0.000000e+00> : vector<8x32xf32>
    %80 = tpu.matmul %78, %79, %cst_46 {dimension_numbers = #tpu.dot_dimension_numbers<[1], [0], [0], [1], [0, 0, 1, 1], [], []>} : vector<8x128xbf16>, vector<128x32xbf16>, vector<8x32xf32> -> vector<8x32xf32>
    %c0_47 = arith.constant 0 : index
    %c0_48 = arith.constant 0 : index
    %81 = vector.load %arg13[%c0_47, %c0_48] : memref<1x32xf32, #tpu.memory_space<vmem>>, vector<1x32xf32>
    %82 = vector.broadcast %81 : vector<1x32xf32> to vector<8x32xf32>
    %83 = arith.addf %80, %82 : vector<8x32xf32>
    %84 = arith.addf %83, %69 : vector<8x32xf32>
    %c0_49 = arith.constant 0 : index
    %c0_50 = arith.constant 0 : index
    %85 = vector.load %arg16[%c0_49, %c0_50] : memref<1x32xf32, #tpu.memory_space<vmem>>, vector<1x32xf32>
    %c0_51 = arith.constant 0 : index
    %c0_52 = arith.constant 0 : index
    %86 = vector.load %arg17[%c0_51, %c0_52] : memref<1x32xf32, #tpu.memory_space<vmem>>, vector<1x32xf32>
    %cst_53 = arith.constant dense<0.000000e+00> : vector<8xf32>
    %87 = vector.multi_reduction <add>, %84, %cst_53 [1] : vector<8x32xf32> to vector<8xf32>
    %88 = vector.shape_cast %87 : vector<8xf32> to vector<8x1xf32>
    %cst_54 = arith.constant 3.200000e+01 : f32
    %89 = vector.broadcast %cst_54 : f32 to vector<8x1xf32>
    %90 = arith.divf %88, %89 : vector<8x1xf32>
    %91 = vector.broadcast %90 : vector<8x1xf32> to vector<8x32xf32>
    %92 = arith.subf %84, %91 : vector<8x32xf32>
    %93 = arith.mulf %92, %92 : vector<8x32xf32>
    %cst_55 = arith.constant dense<0.000000e+00> : vector<8xf32>
    %94 = vector.multi_reduction <add>, %93, %cst_55 [1] : vector<8x32xf32> to vector<8xf32>
    %95 = vector.shape_cast %94 : vector<8xf32> to vector<8x1xf32>
    %cst_56 = arith.constant 3.200000e+01 : f32
    %96 = vector.broadcast %cst_56 : f32 to vector<8x1xf32>
    %97 = arith.divf %95, %96 : vector<8x1xf32>
    %98 = vector.broadcast %90 : vector<8x1xf32> to vector<8x32xf32>
    %99 = arith.subf %84, %98 : vector<8x32xf32>
    %cst_57 = arith.constant 9.99999974E-6 : f32
    %100 = vector.broadcast %cst_57 : f32 to vector<8x1xf32>
    %101 = arith.addf %97, %100 : vector<8x1xf32>
    %102 = math.rsqrt %101 : vector<8x1xf32>
    %103 = vector.broadcast %102 : vector<8x1xf32> to vector<8x32xf32>
    %104 = arith.mulf %99, %103 : vector<8x32xf32>
    %105 = vector.broadcast %85 : vector<1x32xf32> to vector<8x32xf32>
    %106 = arith.mulf %104, %105 : vector<8x32xf32>
    %107 = vector.broadcast %86 : vector<1x32xf32> to vector<8x32xf32>
    %108 = arith.addf %106, %107 : vector<8x32xf32>
    %c0_58 = arith.constant 0 : index
    %c0_59 = arith.constant 0 : index
    %c0_60 = arith.constant 0 : index
    %109 = vector.load %arg18[%c0_58, %c0_59, %c0_60] : memref<1x8x32xf32, #tpu.memory_space<vmem>>, vector<1x8x32xf32>
    %110 = vector.shape_cast %109 : vector<1x8x32xf32> to vector<8x32xf32>
    %111 = vector.shape_cast %108 : vector<8x32xf32> to vector<1x8x32xf32>
    tpu.vector_store %arg18[%c0_58, %c0_59, %c0_60], %111 {strides = array<i32>} : memref<1x8x32xf32, #tpu.memory_space<vmem>>, vector<1x8x32xf32>,
    return
  }
  func.func @transform_0(%arg0: i32) -> (i32, i32, i32) {
    %c0_i32 = arith.constant 0 : i32
    %c0_i32_0 = arith.constant 0 : i32
    %c0_i32_1 = arith.constant 0 : i32
    return %arg0, %c0_i32, %c0_i32_0 : i32, i32, i32
  }
  func.func @transform_1(%arg0: i32) -> (i32, i32, i32) {
    %c0_i32 = arith.constant 0 : i32
    %c0_i32_0 = arith.constant 0 : i32
    %c0_i32_1 = arith.constant 0 : i32
    return %arg0, %c0_i32, %c0_i32_0 : i32, i32, i32
  }
  func.func @transform_2(%arg0: i32) -> (i32, i32) {
    %c0_i32 = arith.constant 0 : i32
    %c0_i32_0 = arith.constant 0 : i32
    %c0_i32_1 = arith.constant 0 : i32
    return %c0_i32, %c0_i32_0 : i32, i32
  }
  func.func @transform_3(%arg0: i32) -> (i32, i32) {
    %c0_i32 = arith.constant 0 : i32
    %c0_i32_0 = arith.constant 0 : i32
    %c0_i32_1 = arith.constant 0 : i32
    return %c0_i32, %c0_i32_0 : i32, i32
  }
  func.func @transform_4(%arg0: i32) -> (i32, i32) {
    %c0_i32 = arith.constant 0 : i32
    %c0_i32_0 = arith.constant 0 : i32
    %c0_i32_1 = arith.constant 0 : i32
    return %c0_i32, %c0_i32_0 : i32, i32
  }
  func.func @transform_5(%arg0: i32) -> (i32, i32) {
    %c0_i32 = arith.constant 0 : i32
    %c0_i32_0 = arith.constant 0 : i32
    %c0_i32_1 = arith.constant 0 : i32
    return %c0_i32, %c0_i32_0 : i32, i32
  }
  func.func @transform_6(%arg0: i32) -> (i32, i32) {
    %c0_i32 = arith.constant 0 : i32
    %c0_i32_0 = arith.constant 0 : i32
    %c0_i32_1 = arith.constant 0 : i32
    return %c0_i32, %c0_i32_0 : i32, i32
  }
  func.func @transform_7(%arg0: i32) -> (i32, i32) {
    %c0_i32 = arith.constant 0 : i32
    %c0_i32_0 = arith.constant 0 : i32
    %c0_i32_1 = arith.constant 0 : i32
    return %c0_i32, %c0_i32_0 : i32, i32
  }
  func.func @transform_8(%arg0: i32) -> (i32, i32) {
    %c0_i32 = arith.constant 0 : i32
    %c0_i32_0 = arith.constant 0 : i32
    %c0_i32_1 = arith.constant 0 : i32
    return %c0_i32, %c0_i32_0 : i32, i32
  }
  func.func @transform_9(%arg0: i32) -> (i32, i32) {
    %c0_i32 = arith.constant 0 : i32
    %c0_i32_0 = arith.constant 0 : i32
    %c0_i32_1 = arith.constant 0 : i32
    return %c0_i32, %c0_i32_0 : i32, i32
  }
  func.func @transform_10(%arg0: i32) -> (i32, i32) {
    %c0_i32 = arith.constant 0 : i32
    %c0_i32_0 = arith.constant 0 : i32
    %c0_i32_1 = arith.constant 0 : i32
    return %c0_i32, %c0_i32_0 : i32, i32
  }
  func.func @transform_11(%arg0: i32) -> (i32, i32) {
    %c0_i32 = arith.constant 0 : i32
    %c0_i32_0 = arith.constant 0 : i32
    %c0_i32_1 = arith.constant 0 : i32
    return %c0_i32, %c0_i32_0 : i32, i32
  }
  func.func @transform_12(%arg0: i32) -> (i32, i32) {
    %c0_i32 = arith.constant 0 : i32
    %c0_i32_0 = arith.constant 0 : i32
    %c0_i32_1 = arith.constant 0 : i32
    return %c0_i32, %c0_i32_0 : i32, i32
  }
  func.func @transform_13(%arg0: i32) -> (i32, i32) {
    %c0_i32 = arith.constant 0 : i32
    %c0_i32_0 = arith.constant 0 : i32
    %c0_i32_1 = arith.constant 0 : i32
    return %c0_i32, %c0_i32_0 : i32, i32
  }
  func.func @transform_14(%arg0: i32) -> (i32, i32) {
    %c0_i32 = arith.constant 0 : i32
    %c0_i32_0 = arith.constant 0 : i32
    %c0_i32_1 = arith.constant 0 : i32
    return %c0_i32, %c0_i32_0 : i32, i32
  }
  func.func @transform_15(%arg0: i32) -> (i32, i32) {
    %c0_i32 = arith.constant 0 : i32
    %c0_i32_0 = arith.constant 0 : i32
    %c0_i32_1 = arith.constant 0 : i32
    return %c0_i32, %c0_i32_0 : i32, i32
  }
  func.func @transform_16(%arg0: i32) -> (i32, i32) {
    %c0_i32 = arith.constant 0 : i32
    %c0_i32_0 = arith.constant 0 : i32
    %c0_i32_1 = arith.constant 0 : i32
    return %c0_i32, %c0_i32_0 : i32, i32
  }
  func.func @transform_17(%arg0: i32) -> (i32, i32, i32) {
    %c0_i32 = arith.constant 0 : i32
    %c0_i32_0 = arith.constant 0 : i32
    %c0_i32_1 = arith.constant 0 : i32
    return %arg0, %c0_i32, %c0_i32_0 : i32, i32, i32
  }
}

</mosaic_0001>

<llo_original>
// kernel: tpu_custom_call.1
$region0: #{tpu_custom_call.1}
  #allocation0 [shape = 'u32[]', space=smem, size = 0x4, offset = 0x4, fixed_abs, tag = 'smem constant byte address 0x4 - core index']
  #allocation1 [shape = 'u32[144,128]{1,0:T(1,128)}', space=vmem, size = 0x12000, scoped, tag = 'internal scratch']
  %s0 = inlined_call_operand.vmem [shape: f32[4,8,32], index: 0, kind: input, shape index: {}]
  %s1 = inlined_call_operand.vmem [shape: f32[4,8,64], index: 1, kind: input, shape index: {}]
  %s2 = inlined_call_operand.vmem [shape: bf16[32,48], index: 2, kind: input, shape index: {}]
  %s3 = inlined_call_operand.vmem [shape: f32[8,64], index: 3, kind: input, shape index: {}]
  %s4 = inlined_call_operand.vmem [shape: f32[64,8], index: 4, kind: input, shape index: {}]
  %s5 = inlined_call_operand.vmem [shape: f32[8,64], index: 5, kind: input, shape index: {}]
  %s6 = inlined_call_operand.vmem [shape: f32[64,8], index: 6, kind: input, shape index: {}]
  %s7 = inlined_call_operand.vmem [shape: f32[64,32], index: 7, kind: input, shape index: {}]
  %s8 = inlined_call_operand.vmem [shape: f32[1,32], index: 8, kind: input, shape index: {}]
  %s9 = inlined_call_operand.vmem [shape: bf16[32,128], index: 9, kind: input, shape index: {}]
  %s10 = inlined_call_operand.vmem [shape: f32[1,128], index: 10, kind: input, shape index: {}]
  %s11 = inlined_call_operand.vmem [shape: bf16[128,32], index: 11, kind: input, shape index: {}]
  %s12 = inlined_call_operand.vmem [shape: f32[1,32], index: 12, kind: input, shape index: {}]
  %s13 = inlined_call_operand.vmem [shape: f32[1,32], index: 13, kind: input, shape index: {}]
  %s14 = inlined_call_operand.vmem [shape: f32[1,32], index: 14, kind: input, shape index: {}]
  %s15 = inlined_call_operand.vmem [shape: f32[1,32], index: 15, kind: input, shape index: {}]
  %s16 = inlined_call_operand.vmem [shape: f32[1,32], index: 16, kind: input, shape index: {}]
  %s17 = inlined_call_operand.hbm [shape: f32[4,8,32], index: 17, kind: output, shape index: {}]
  %s18 = sld [smem:[#allocation0]]
  $region101: #{tpu_custom_call.1} parent=0
    _
  %s20 = ssub.s32 1, %s18
  %s21 = scalar_select 0, %s20, %s18
  $region1: #{tpu_custom_call.1} parent=0
    #allocation2 [shape = 'u8[8192]{0}', space=vmem, size = 0x2000, scoped, tag = 'output window, operand 0']
    #allocation3 [shape = 's32[2]{0}', space=sflag, size = 0x8, scoped, tag = 'scoped memory for tpu_custom_call.1']
    %22 = vsyncpa [#allocation3], 0
    %s23 = scalar_lea.sflag [#allocation3], 1
    %24 = vsyncpa %s23, 0
    loop: start=0, step=1, limit=6
    $region2: #{tpu_custom_call.1} parent=1 // loop_pre_header
      _
    $region3: #{tpu_custom_call.1} parent=1 // loop_header
      %s26 = sphi 0, %s30
      %p27 = scmp.ge.s32.totalorder %s26, 6
      %s36 = sphi 0, %s38
      %s39 = sphi 0, %s36
      %s40 = sphi 0, %s39
      %s56 = sphi 0, %s40
      %s62 = sphi 0, %s64
      %s65 = sphi 0, %s62
      %s66 = sphi 0, %s65
      %s82 = sphi 0, %s66
      %s86 = sphi 0, %s86
      %s88 = sphi 0, %s86
      %s89 = sphi 0, %s88
      %s103 = sphi 0, %s89
      %s107 = sphi 0, %s107
      %s109 = sphi 0, %s107
      %s110 = sphi 0, %s109
      %s124 = sphi 0, %s110
      %s128 = sphi 0, %s128
      %s130 = sphi 0, %s128
      %s131 = sphi 0, %s130
      %s145 = sphi 0, %s131
      %s149 = sphi 0, %s149
      %s151 = sphi 0, %s149
      %s152 = sphi 0, %s151
      %s166 = sphi 0, %s152
      %s170 = sphi 0, %s170
      %s172 = sphi 0, %s170
      %s173 = sphi 0, %s172
      %s187 = sphi 0, %s173
      %s191 = sphi 0, %s191
      %s193 = sphi 0, %s191
      %s194 = sphi 0, %s193
      %s208 = sphi 0, %s194
      %s212 = sphi 0, %s212
      %s214 = sphi 0, %s212
      %s215 = sphi 0, %s214
      %s229 = sphi 0, %s215
      %s233 = sphi 0, %s233
      %s235 = sphi 0, %s233
      %s236 = sphi 0, %s235
      %s250 = sphi 0, %s236
      %s254 = sphi 0, %s254
      %s256 = sphi 0, %s254
      %s257 = sphi 0, %s256
      %s271 = sphi 0, %s257
      %s275 = sphi 0, %s275
      %s277 = sphi 0, %s275
      %s278 = sphi 0, %s277
      %s292 = sphi 0, %s278
      %s296 = sphi 0, %s296
      %s298 = sphi 0, %s296
      %s299 = sphi 0, %s298
      %s313 = sphi 0, %s299
      %s317 = sphi 0, %s317
      %s319 = sphi 0, %s317
      %s320 = sphi 0, %s319
      %s334 = sphi 0, %s320
      %s338 = sphi 0, %s338
      %s340 = sphi 0, %s338
      %s341 = sphi 0, %s340
      %s355 = sphi 0, %s341
      %s359 = sphi 0, %s359
      %s361 = sphi 0, %s359
      %s362 = sphi 0, %s361
      %s376 = sphi 0, %s362
      %s380 = sphi 0, %s380
      %s382 = sphi 0, %s380
      %s383 = sphi 0, %s382
      %s397 = sphi 0, %s383
      %s403 = sphi 0, %s405
      %s406 = sphi 0, %s403
      %s407 = sphi 0, %s406
      %s423 = sphi 0, %s407
    $region4: #{tpu_custom_call.1} parent=1 // loop_header_branch
      %29 = sbr.rel (%p27) target = $region8
    $region5: #{tpu_custom_call.1} parent=1 // loop_body
      %s31 = ssub.s32 %s26, 1
      %s32 = ssub.s32 %s26, 2
      %s33 = sadd.s32 %s26, 1
      %s34 = ssub.s32 %s26, %s33
      %p35 = scmp.eq.s32.totalorder %s34, 0
      %s37 = sadd.s32 %s36, 1
      %s38 = scalar_select %p35, %s36, %s37
      %p41 = pneg %p35
      %p42 = scmp.eq.s32.totalorder %s26, 3
      %p43 = por %p41, %p42
      %p44 = scmp.ne.s32.totalorder %s36, %s39
      %p45 = scmp.eq.s32.totalorder %s26, 0
      %p46 = por %p44, %p45
      %p47 = scmp.ne.s32.totalorder %s36, %s39
      %p48 = scmp.eq.s32.totalorder %s31, 3
      %p49 = por %p47, %p48
      %p50 = scmp.ne.s32.totalorder %s39, %s40
      %p51 = scmp.eq.s32.totalorder %s31, 0
      %p52 = por %p50, %p51
      %p53 = scmp.ne.s32.totalorder %s39, %s40
      %p54 = scmp.eq.s32.totalorder %s32, 3
      %p55 = por %p53, %p54
      %p57 = scmp.ne.s32.totalorder %s40, %s56
      %p58 = scmp.eq.s32.totalorder %s32, 0
      %p59 = por %p57, %p58
      %s60 = ssub.s32 %s26, %s33
      %p61 = scmp.eq.s32.totalorder %s60, 0
      %s63 = sadd.s32 %s62, 1
      %s64 = scalar_select %p61, %s62, %s63
      %p67 = pneg %p61
      %p68 = scmp.eq.s32.totalorder %s26, 3
      %p69 = por %p67, %p68
      %p70 = scmp.ne.s32.totalorder %s62, %s65
      %p71 = scmp.eq.s32.totalorder %s26, 0
      %p72 = por %p70, %p71
      %p73 = scmp.ne.s32.totalorder %s62, %s65
      %p74 = scmp.eq.s32.totalorder %s31, 3
      %p75 = por %p73, %p74
      %p76 = scmp.ne.s32.totalorder %s65, %s66
      %p77 = scmp.eq.s32.totalorder %s31, 0
      %p78 = por %p76, %p77
      %p79 = scmp.ne.s32.totalorder %s65, %s66
      %p80 = scmp.eq.s32.totalorder %s32, 3
      %p81 = por %p79, %p80
      %p83 = scmp.ne.s32.totalorder %s66, %s82
      %p84 = scmp.eq.s32.totalorder %s32, 0
      %p85 = por %p83, %p84
      %s87 = sadd.s32 %s86, 1
      %p90 = scmp.eq.s32.totalorder %s26, 3
      %p91 = scmp.ne.s32.totalorder %s86, %s88
      %p92 = scmp.eq.s32.totalorder %s26, 0
      %p93 = por %p91, %p92
      %p94 = scmp.ne.s32.totalorder %s86, %s88
      %p95 = scmp.eq.s32.totalorder %s31, 3
      %p96 = por %p94, %p95
      %p97 = scmp.ne.s32.totalorder %s88, %s89
      %p98 = scmp.eq.s32.totalorder %s31, 0
      %p99 = por %p97, %p98
      %p100 = scmp.ne.s32.totalorder %s88, %s89
      %p101 = scmp.eq.s32.totalorder %s32, 3
      %p102 = por %p100, %p101
      %p104 = scmp.ne.s32.totalorder %s89, %s103
      %p105 = scmp.eq.s32.totalorder %s32, 0
      %p106 = por %p104, %p105
      %s108 = sadd.s32 %s107, 1
      %p111 = scmp.eq.s32.totalorder %s26, 3
      %p112 = scmp.ne.s32.totalorder %s107, %s109
      %p113 = scmp.eq.s32.totalorder %s26, 0
      %p114 = por %p112, %p113
      %p115 = scmp.ne.s32.totalorder %s107, %s109
      %p116 = scmp.eq.s32.totalorder %s31, 3
      %p117 = por %p115, %p116
      %p118 = scmp.ne.s32.totalorder %s109, %s110
      %p119 = scmp.eq.s32.totalorder %s31, 0
      %p120 = por %p118, %p119
      %p121 = scmp.ne.s32.totalorder %s109, %s110
      %p122 = scmp.eq.s32.totalorder %s32, 3
      %p123 = por %p121, %p122
      %p125 = scmp.ne.s32.totalorder %s110, %s124
      %p126 = scmp.eq.s32.totalorder %s32, 0
      %p127 = por %p125, %p126
      %s129 = sadd.s32 %s128, 1
      %p132 = scmp.eq.s32.totalorder %s26, 3
      %p133 = scmp.ne.s32.totalorder %s128, %s130
      %p134 = scmp.eq.s32.totalorder %s26, 0
      %p135 = por %p133, %p134
      %p136 = scmp.ne.s32.totalorder %s128, %s130
      %p137 = scmp.eq.s32.totalorder %s31, 3
      %p138 = por %p136, %p137
      %p139 = scmp.ne.s32.totalorder %s130, %s131
      %p140 = scmp.eq.s32.totalorder %s31, 0
      %p141 = por %p139, %p140
      %p142 = scmp.ne.s32.totalorder %s130, %s131
      %p143 = scmp.eq.s32.totalorder %s32, 3
      %p144 = por %p142, %p143
      %p146 = scmp.ne.s32.totalorder %s131, %s145
      %p147 = scmp.eq.s32.totalorder %s32, 0
      %p148 = por %p146, %p147
      %s150 = sadd.s32 %s149, 1
      %p153 = scmp.eq.s32.totalorder %s26, 3
      %p154 = scmp.ne.s32.totalorder %s149, %s151
      %p155 = scmp.eq.s32.totalorder %s26, 0
      %p156 = por %p154, %p155
      %p157 = scmp.ne.s32.totalorder %s149, %s151
      %p158 = scmp.eq.s32.totalorder %s31, 3
      %p159 = por %p157, %p158
      %p160 = scmp.ne.s32.totalorder %s151, %s152
      %p161 = scmp.eq.s32.totalorder %s31, 0
      %p162 = por %p160, %p161
      %p163 = scmp.ne.s32.totalorder %s151, %s152
      %p164 = scmp.eq.s32.totalorder %s32, 3
      %p165 = por %p163, %p164
      %p167 = scmp.ne.s32.totalorder %s152, %s166
      %p168 = scmp.eq.s32.totalorder %s32, 0
      %p169 = por %p167, %p168
      %s171 = sadd.s32 %s170, 1
      %p174 = scmp.eq.s32.totalorder %s26, 3
      %p175 = scmp.ne.s32.totalorder %s170, %s172
      %p176 = scmp.eq.s32.totalorder %s26, 0
      %p177 = por %p175, %p176
      %p178 = scmp.ne.s32.totalorder %s170, %s172
      %p179 = scmp.eq.s32.totalorder %s31, 3
      %p180 = por %p178, %p179
      %p181 = scmp.ne.s32.totalorder %s172, %s173
      %p182 = scmp.eq.s32.totalorder %s31, 0
      %p183 = por %p181, %p182
      %p184 = scmp.ne.s32.totalorder %s172, %s173
      %p185 = scmp.eq.s32.totalorder %s32, 3
      %p186 = por %p184, %p185
      %p188 = scmp.ne.s32.totalorder %s173, %s187
      %p189 = scmp.eq.s32.totalorder %s32, 0
      %p190 = por %p188, %p189
      %s192 = sadd.s32 %s191, 1
      %p195 = scmp.eq.s32.totalorder %s26, 3
      %p196 = scmp.ne.s32.totalorder %s191, %s193
      %p197 = scmp.eq.s32.totalorder %s26, 0
      %p198 = por %p196, %p197
      %p199 = scmp.ne.s32.totalorder %s191, %s193
      %p200 = scmp.eq.s32.totalorder %s31, 3
      %p201 = por %p199, %p200
      %p202 = scmp.ne.s32.totalorder %s193, %s194
      %p203 = scmp.eq.s32.totalorder %s31, 0
      %p204 = por %p202, %p203
      %p205 = scmp.ne.s32.totalorder %s193, %s194
      %p206 = scmp.eq.s32.totalorder %s32, 3
      %p207 = por %p205, %p206
      %p209 = scmp.ne.s32.totalorder %s194, %s208
      %p210 = scmp.eq.s32.totalorder %s32, 0
      %p211 = por %p209, %p210
      %s213 = sadd.s32 %s212, 1
      %p216 = scmp.eq.s32.totalorder %s26, 3
      %p217 = scmp.ne.s32.totalorder %s212, %s214
      %p218 = scmp.eq.s32.totalorder %s26, 0
      %p219 = por %p217, %p218
      %p220 = scmp.ne.s32.totalorder %s212, %s214
      %p221 = scmp.eq.s32.totalorder %s31, 3
      %p222 = por %p220, %p221
      %p223 = scmp.ne.s32.totalorder %s214, %s215
      %p224 = scmp.eq.s32.totalorder %s31, 0
      %p225 = por %p223, %p224
      %p226 = scmp.ne.s32.totalorder %s214, %s215
      %p227 = scmp.eq.s32.totalorder %s32, 3
      %p228 = por %p226, %p227
      %p230 = scmp.ne.s32.totalorder %s215, %s229
      %p231 = scmp.eq.s32.totalorder %s32, 0
      %p232 = por %p230, %p231
      %s234 = sadd.s32 %s233, 1
      %p237 = scmp.eq.s32.totalorder %s26, 3
      %p238 = scmp.ne.s32.totalorder %s233, %s235
      %p239 = scmp.eq.s32.totalorder %s26, 0
      %p240 = por %p238, %p239
      %p241 = scmp.ne.s32.totalorder %s233, %s235
      %p242 = scmp.eq.s32.totalorder %s31, 3
      %p243 = por %p241, %p242
      %p244 = scmp.ne.s32.totalorder %s235, %s236
      %p245 = scmp.eq.s32.totalorder %s31, 0
      %p246 = por %p244, %p245
      %p247 = scmp.ne.s32.totalorder %s235, %s236
      %p248 = scmp.eq.s32.totalorder %s32, 3
      %p249 = por %p247, %p248
      %p251 = scmp.ne.s32.totalorder %s236, %s250
      %p252 = scmp.eq.s32.totalorder %s32, 0
      %p253 = por %p251, %p252
      %s255 = sadd.s32 %s254, 1
      %p258 = scmp.eq.s32.totalorder %s26, 3
      %p259 = scmp.ne.s32.totalorder %s254, %s256
      %p260 = scmp.eq.s32.totalorder %s26, 0
      %p261 = por %p259, %p260
      %p262 = scmp.ne.s32.totalorder %s254, %s256
      %p263 = scmp.eq.s32.totalorder %s31, 3
      %p264 = por %p262, %p263
      %p265 = scmp.ne.s32.totalorder %s256, %s257
      %p266 = scmp.eq.s32.totalorder %s31, 0
      %p267 = por %p265, %p266
      %p268 = scmp.ne.s32.totalorder %s256, %s257
      %p269 = scmp.eq.s32.totalorder %s32, 3
      %p270 = por %p268, %p269
      %p272 = scmp.ne.s32.totalorder %s257, %s271
      %p273 = scmp.eq.s32.totalorder %s32, 0
      %p274 = por %p272, %p273
      %s276 = sadd.s32 %s275, 1
      %p279 = scmp.eq.s32.totalorder %s26, 3
      %p280 = scmp.ne.s32.totalorder %s275, %s277
      %p281 = scmp.eq.s32.totalorder %s26, 0
      %p282 = por %p280, %p281
      %p283 = scmp.ne.s32.totalorder %s275, %s277
      %p284 = scmp.eq.s32.totalorder %s31, 3
      %p285 = por %p283, %p284
      %p286 = scmp.ne.s32.totalorder %s277, %s278
      %p287 = scmp.eq.s32.totalorder %s31, 0
      %p288 = por %p286, %p287
      %p289 = scmp.ne.s32.totalorder %s277, %s278
      %p290 = scmp.eq.s32.totalorder %s32, 3
      %p291 = por %p289, %p290
      %p293 = scmp.ne.s32.totalorder %s278, %s292
      %p294 = scmp.eq.s32.totalorder %s32, 0
      %p295 = por %p293, %p294
      %s297 = sadd.s32 %s296, 1
      %p300 = scmp.eq.s32.totalorder %s26, 3
      %p301 = scmp.ne.s32.totalorder %s296, %s298
      %p302 = scmp.eq.s32.totalorder %s26, 0
      %p303 = por %p301, %p302
      %p304 = scmp.ne.s32.totalorder %s296, %s298
      %p305 = scmp.eq.s32.totalorder %s31, 3
      %p306 = por %p304, %p305
      %p307 = scmp.ne.s32.totalorder %s298, %s299
      %p308 = scmp.eq.s32.totalorder %s31, 0
      %p309 = por %p307, %p308
      %p310 = scmp.ne.s32.totalorder %s298, %s299
      %p311 = scmp.eq.s32.totalorder %s32, 3
      %p312 = por %p310, %p311
      %p314 = scmp.ne.s32.totalorder %s299, %s313
      %p315 = scmp.eq.s32.totalorder %s32, 0
      %p316 = por %p314, %p315
      %s318 = sadd.s32 %s317, 1
      %p321 = scmp.eq.s32.totalorder %s26, 3
      %p322 = scmp.ne.s32.totalorder %s317, %s319
      %p323 = scmp.eq.s32.totalorder %s26, 0
      %p324 = por %p322, %p323
      %p325 = scmp.ne.s32.totalorder %s317, %s319
      %p326 = scmp.eq.s32.totalorder %s31, 3
      %p327 = por %p325, %p326
      %p328 = scmp.ne.s32.totalorder %s319, %s320
      %p329 = scmp.eq.s32.totalorder %s31, 0
      %p330 = por %p328, %p329
      %p331 = scmp.ne.s32.totalorder %s319, %s320
      %p332 = scmp.eq.s32.totalorder %s32, 3
      %p333 = por %p331, %p332
      %p335 = scmp.ne.s32.totalorder %s320, %s334
      %p336 = scmp.eq.s32.totalorder %s32, 0
      %p337 = por %p335, %p336
      %s339 = sadd.s32 %s338, 1
      %p342 = scmp.eq.s32.totalorder %s26, 3
      %p343 = scmp.ne.s32.totalorder %s338, %s340
      %p344 = scmp.eq.s32.totalorder %s26, 0
      %p345 = por %p343, %p344
      %p346 = scmp.ne.s32.totalorder %s338, %s340
      %p347 = scmp.eq.s32.totalorder %s31, 3
      %p348 = por %p346, %p347
      %p349 = scmp.ne.s32.totalorder %s340, %s341
      %p350 = scmp.eq.s32.totalorder %s31, 0
      %p351 = por %p349, %p350
      %p352 = scmp.ne.s32.totalorder %s340, %s341
      %p353 = scmp.eq.s32.totalorder %s32, 3
      %p354 = por %p352, %p353
      %p356 = scmp.ne.s32.totalorder %s341, %s355
      %p357 = scmp.eq.s32.totalorder %s32, 0
      %p358 = por %p356, %p357
      %s360 = sadd.s32 %s359, 1
      %p363 = scmp.eq.s32.totalorder %s26, 3
      %p364 = scmp.ne.s32.totalorder %s359, %s361
      %p365 = scmp.eq.s32.totalorder %s26, 0
      %p366 = por %p364, %p365
      %p367 = scmp.ne.s32.totalorder %s359, %s361
      %p368 = scmp.eq.s32.totalorder %s31, 3
      %p369 = por %p367, %p368
      %p370 = scmp.ne.s32.totalorder %s361, %s362
      %p371 = scmp.eq.s32.totalorder %s31, 0
      %p372 = por %p370, %p371
      %p373 = scmp.ne.s32.totalorder %s361, %s362
      %p374 = scmp.eq.s32.totalorder %s32, 3
      %p375 = por %p373, %p374
      %p377 = scmp.ne.s32.totalorder %s362, %s376
      %p378 = scmp.eq.s32.totalorder %s32, 0
      %p379 = por %p377, %p378
      %s381 = sadd.s32 %s380, 1
      %p384 = scmp.eq.s32.totalorder %s26, 3
      %p385 = scmp.ne.s32.totalorder %s380, %s382
      %p386 = scmp.eq.s32.totalorder %s26, 0
      %p387 = por %p385, %p386
      %p388 = scmp.ne.s32.totalorder %s380, %s382
      %p389 = scmp.eq.s32.totalorder %s31, 3
      %p390 = por %p388, %p389
      %p391 = scmp.ne.s32.totalorder %s382, %s383
      %p392 = scmp.eq.s32.totalorder %s31, 0
      %p393 = por %p391, %p392
      %p394 = scmp.ne.s32.totalorder %s382, %s383
      %p395 = scmp.eq.s32.totalorder %s32, 3
      %p396 = por %p394, %p395
      %p398 = scmp.ne.s32.totalorder %s383, %s397
      %p399 = scmp.eq.s32.totalorder %s32, 0
      %p400 = por %p398, %p399
      %s401 = ssub.s32 %s26, %s33
      %p402 = scmp.eq.s32.totalorder %s401, 0
      %s404 = sadd.s32 %s403, 1
      %s405 = scalar_select %p402, %s403, %s404
      %p408 = pneg %p402
      %p409 = scmp.eq.s32.totalorder %s26, 3
      %p410 = por %p408, %p409
      %p411 = scmp.ne.s32.totalorder %s403, %s406
      %p412 = scmp.eq.s32.totalorder %s26, 0
      %p413 = por %p411, %p412
      %p414 = scmp.ne.s32.totalorder %s403, %s406
      %p415 = scmp.eq.s32.totalorder %s31, 3
      %p416 = por %p414, %p415
      %p417 = scmp.ne.s32.totalorder %s406, %s407
      %p418 = scmp.eq.s32.totalorder %s31, 0
      %p419 = por %p417, %p418
      %p420 = scmp.ne.s32.totalorder %s406, %s407
      %p421 = scmp.eq.s32.totalorder %s32, 3
      %p422 = por %p420, %p421
      %p424 = scmp.ne.s32.totalorder %s407, %s423
      %p425 = scmp.eq.s32.totalorder %s32, 0
      %p426 = por %p424, %p425
      %p427 = scmp.le.s32.totalorder 1, %s26
      %p428 = scmp.lt.s32.totalorder %s26, 5
      %p429 = pnand %p427, %p428
      %p430 = pneg %p429
      // Predicated region
      $region9: #{tpu_custom_call.1} parent=5 // pred_check
        _
      $region10: #{tpu_custom_call.1} parent=5 // pred_check_branch
        %432 = sbr.rel (%p429) target = $region12
      $region11: #{tpu_custom_call.1} parent=5 // pred_region
        %s433 = ssub.s32 %s26, 1
        // Predicated region
        $region13: #{tpu_custom_call.1} parent=11 // pred_check
          %p434 = pneg %p99
        $region14: #{tpu_custom_call.1} parent=11 // pred_check_branch
          %436 = sbr.rel (%p434) target = $region16
        $region15: #{tpu_custom_call.1} parent=11 // pred_region
          _
        $region16: #{tpu_custom_call.1} parent=11 // pred_fallthru
          _
        // Predicated region
        $region17: #{tpu_custom_call.1} parent=11 // pred_check
          %p437 = pneg %p120
        $region18: #{tpu_custom_call.1} parent=11 // pred_check_branch
          %439 = sbr.rel (%p437) target = $region20
        $region19: #{tpu_custom_call.1} parent=11 // pred_region
          _
        $region20: #{tpu_custom_call.1} parent=11 // pred_fallthru
          _
        // Predicated region
        $region21: #{tpu_custom_call.1} parent=11 // pred_check
          %p440 = pneg %p141
        $region22: #{tpu_custom_call.1} parent=11 // pred_check_branch
          %442 = sbr.rel (%p440) target = $region24
        $region23: #{tpu_custom_call.1} parent=11 // pred_region
          _
        $region24: #{tpu_custom_call.1} parent=11 // pred_fallthru
          _
        // Predicated region
        $region25: #{tpu_custom_call.1} parent=11 // pred_check
          %p443 = pneg %p162
        $region26: #{tpu_custom_call.1} parent=11 // pred_check_branch
          %445 = sbr.rel (%p443) target = $region28
        $region27: #{tpu_custom_call.1} parent=11 // pred_region
          _
        $region28: #{tpu_custom_call.1} parent=11 // pred_fallthru
          _
        // Predicated region
        $region29: #{tpu_custom_call.1} parent=11 // pred_check
          %p446 = pneg %p183
        $region30: #{tpu_custom_call.1} parent=11 // pred_check_branch
          %448 = sbr.rel (%p446) target = $region32
        $region31: #{tpu_custom_call.1} parent=11 // pred_region
          _
        $region32: #{tpu_custom_call.1} parent=11 // pred_fallthru
          _
        // Predicated region
        $region33: #{tpu_custom_call.1} parent=11 // pred_check
          %p449 = pneg %p204
        $region34: #{tpu_custom_call.1} parent=11 // pred_check_branch
          %451 = sbr.rel (%p449) target = $region36
        $region35: #{tpu_custom_call.1} parent=11 // pred_region
          _
        $region36: #{tpu_custom_call.1} parent=11 // pred_fallthru
          _
        // Predicated region
        $region37: #{tpu_custom_call.1} parent=11 // pred_check
          %p452 = pneg %p225
        $region38: #{tpu_custom_call.1} parent=11 // pred_check_branch
          %454 = sbr.rel (%p452) target = $region40
        $region39: #{tpu_custom_call.1} parent=11 // pred_region
          _
        $region40: #{tpu_custom_call.1} parent=11 // pred_fallthru
          _
        // Predicated region
        $region41: #{tpu_custom_call.1} parent=11 // pred_check
          %p455 = pneg %p246
        $region42: #{tpu_custom_call.1} parent=11 // pred_check_branch
          %457 = sbr.rel (%p455) target = $region44
        $region43: #{tpu_custom_call.1} parent=11 // pred_region
          _
        $region44: #{tpu_custom_call.1} parent=11 // pred_fallthru
          _
        // Predicated region
        $region45: #{tpu_custom_call.1} parent=11 // pred_check
          %p458 = pneg %p267
        $region46: #{tpu_custom_call.1} parent=11 // pred_check_branch
          %460 = sbr.rel (%p458) target = $region48
        $region47: #{tpu_custom_call.1} parent=11 // pred_region
          _
        $region48: #{tpu_custom_call.1} parent=11 // pred_fallthru
          _
        // Predicated region
        $region49: #{tpu_custom_call.1} parent=11 // pred_check
          %p461 = pneg %p288
        $region50: #{tpu_custom_call.1} parent=11 // pred_check_branch
          %463 = sbr.rel (%p461) target = $region52
        $region51: #{tpu_custom_call.1} parent=11 // pred_region
          _
        $region52: #{tpu_custom_call.1} parent=11 // pred_fallthru
          _
        // Predicated region
        $region53: #{tpu_custom_call.1} parent=11 // pred_check
          %p464 = pneg %p309
        $region54: #{tpu_custom_call.1} parent=11 // pred_check_branch
          %466 = sbr.rel (%p464) target = $region56
        $region55: #{tpu_custom_call.1} parent=11 // pred_region
          _
        $region56: #{tpu_custom_call.1} parent=11 // pred_fallthru
          _
        // Predicated region
        $region57: #{tpu_custom_call.1} parent=11 // pred_check
          %p467 = pneg %p330
        $region58: #{tpu_custom_call.1} parent=11 // pred_check_branch
          %469 = sbr.rel (%p467) target = $region60
        $region59: #{tpu_custom_call.1} parent=11 // pred_region
          _
        $region60: #{tpu_custom_call.1} parent=11 // pred_fallthru
          _
        // Predicated region
        $region61: #{tpu_custom_call.1} parent=11 // pred_check
          %p470 = pneg %p351
        $region62: #{tpu_custom_call.1} parent=11 // pred_check_branch
          %472 = sbr.rel (%p470) target = $region64
        $region63: #{tpu_custom_call.1} parent=11 // pred_region
          _
        $region64: #{tpu_custom_call.1} parent=11 // pred_fallthru
          _
        // Predicated region
        $region65: #{tpu_custom_call.1} parent=11 // pred_check
          %p473 = pneg %p372
        $region66: #{tpu_custom_call.1} parent=11 // pred_check_branch
          %475 = sbr.rel (%p473) target = $region68
        $region67: #{tpu_custom_call.1} parent=11 // pred_region
          _
        $region68: #{tpu_custom_call.1} parent=11 // pred_fallthru
          _
        // Predicated region
        $region69: #{tpu_custom_call.1} parent=11 // pred_check
          %p476 = pneg %p393
        $region70: #{tpu_custom_call.1} parent=11 // pred_check_branch
          %478 = sbr.rel (%p476) target = $region72
        $region71: #{tpu_custom_call.1} parent=11 // pred_region
          _
        $region72: #{tpu_custom_call.1} parent=11 // pred_fallthru
          _
      $region12: #{tpu_custom_call.1} parent=5 // pred_fallthru
        _
      %p479 = scmp.lt.s32.totalorder %s26, 4
      // Predicated region
      $region73: #{tpu_custom_call.1} parent=5 // pred_check
        %p480 = pneg %p479
      $region74: #{tpu_custom_call.1} parent=5 // pred_check_branch
        %482 = sbr.rel (%p480) target = $region76
      $region75: #{tpu_custom_call.1} parent=5 // pred_region
        // Predicated region
        $region77: #{tpu_custom_call.1} parent=75 // pred_check
          %p483 = pneg %p46
        $region78: #{tpu_custom_call.1} parent=75 // pred_check_branch
          %485 = sbr.rel (%p483) target = $region80
        $region79: #{tpu_custom_call.1} parent=75 // pred_region
          %p486 = scmp.lt.s32.totalorder %s26, 3
          %s487 = scalar_select %p486, %s26, 3
          %s488 = smul.addr %s487, 8
          %s489 = scalar_lea.vmem %s0, %s488
        $region80: #{tpu_custom_call.1} parent=75 // pred_fallthru
          _
        // Predicated region
        $region81: #{tpu_custom_call.1} parent=75 // pred_check
          %p490 = pneg %p72
        $region82: #{tpu_custom_call.1} parent=75 // pred_check_branch
          %492 = sbr.rel (%p490) target = $region84
        $region83: #{tpu_custom_call.1} parent=75 // pred_region
          %p493 = scmp.lt.s32.totalorder %s26, 3
          %s494 = scalar_select %p493, %s26, 3
          %s495 = smul.addr %s494, 8
          %s496 = scalar_lea.vmem %s1, %s495
        $region84: #{tpu_custom_call.1} parent=75 // pred_fallthru
          _
      $region76: #{tpu_custom_call.1} parent=5 // pred_fallthru
        _
      %p497 = scmp.le.s32.totalorder 1, %s26
      %p498 = scmp.lt.s32.totalorder %s26, 5
      %p499 = pnand %p497, %p498
      %p500 = pneg %p499
      // Predicated region
      $region85: #{tpu_custom_call.1} parent=5 // pred_check
        _
      $region86: #{tpu_custom_call.1} parent=5 // pred_check_branch
        %502 = sbr.rel (%p499) target = $region88
      $region87: #{tpu_custom_call.1} parent=5 // pred_region
        %s503 = ssub.s32 %s26, 1
        %p504 = scmp.lt.s32.totalorder %s31, 3
        %s505 = scalar_select %p504, %s31, 3
        %s506 = smul.addr %s505, 8
        %s507 = scalar_lea.vmem %s0, %s506
        %p508 = pneg %p52
        %p509 = pneg %p49
        %p510 = scmp.lt.s32.totalorder %s31, 3
        %s511 = scalar_select %p510, %s31, 3
        %s512 = smul.addr %s511, 8
        %s513 = scalar_lea.vmem %s1, %s512
        %p514 = pneg %p78
        %p515 = pneg %p75
        %p516 = pneg %p99
        %p517 = pneg %p96
        %p518 = pneg %p120
        %p519 = pneg %p117
        %p520 = pneg %p141
        %p521 = pneg %p138
        %p522 = pneg %p162
        %p523 = pneg %p159
        %p524 = pneg %p183
        %p525 = pneg %p180
        %p526 = pneg %p204
        %p527 = pneg %p201
        %p528 = pneg %p225
        %p529 = pneg %p222
        %p530 = pneg %p246
        %p531 = pneg %p243
        %p532 = pneg %p267
        %p533 = pneg %p264
        %p534 = pneg %p288
        %p535 = pneg %p285
        %p536 = pneg %p309
        %p537 = pneg %p306
        %p538 = pneg %p330
        %p539 = pneg %p327
        %p540 = pneg %p351
        %p541 = pneg %p348
        %p542 = pneg %p372
        %p543 = pneg %p369
        %p544 = pneg %p393
        %p545 = pneg %p390
        %p546 = pneg %p419
        %p547 = pneg %p416
        %s548 = sand.u32 %s406, 1
        %s549 = scalar_lea.sflag [#allocation3], %s548
        %s550 = sand.u32 %s406, 1
        %s551 = smul.addr %s550, 8
        %s552 = scalar_lea.vmem [#allocation2], %s551
        %p553 = scmp.lt.s32.totalorder %s31, 3
        %s554 = scalar_select %p553, %s31, 3
        %s555 = smul.addr %s554, 8
        %s556 = scalar_lea.vmem %s0, %s555
        %p557 = scmp.lt.s32.totalorder %s31, 3
        %s558 = scalar_select %p557, %s31, 3
        %s559 = smul.addr %s558, 8
        %s560 = scalar_lea.vmem %s1, %s559
        %v562 = vld [vmem:[%s556] sm:$0xff]
        %v563 = vpack.c.bf16 %v562, %v562
        %v564 = vld [vmem:[%s2] sm:$0xf]
        %v565 = vld [vmem:[%s2 + $0x4] sm:$0xf]
        %v566 = vld [vmem:[%s2 + $0x8] sm:$0xf]
        %v567 = vld [vmem:[%s2 + $0xc] sm:$0xf]
        %v572 = vunpack.c.l.b16 %v564
        %v573 = vunpack.c.l.b16 %v565
        %v574 = vunpack.c.l.b16 %v566
        %v575 = vunpack.c.l.b16 %v567
        %v576 = vpack.c.b16 %v573, %v572
        %v577 = vpack.c.b16 %v575, %v574
        %vm580 = vcmask 261120
        %v582 = vsel %vm580, %v563, 0
        %584 = vmatprep.subr.bf16.mxu0 0
        %585 = vmatpush1.bf16.msra.mxu0 0
        %586 = vmatprep.subr.bf16.mxu0 0
        %587 = vmatpush1.bf16.msra.mxu0 0
        %588 = vmatprep.subr.bf16.mxu0 0
        %589 = vmatpush1.bf16.msra.mxu0 0
        %590 = vmatprep.subr.bf16.mxu0 0
        %591 = vmatpush1.bf16.msra.mxu0 0
        %592 = vmatprep.subr.bf16.mxu0 0
        %593 = vmatpush1.bf16.msra.mxu0 0
        %594 = vmatprep.subr.bf16.mxu0 0
        %595 = vmatpush1.bf16.msra.mxu0 0
        %596 = vmatprep.subr.bf16.mxu0 0
        %597 = vmatpush1.bf16.msra.mxu0 %v577
        %598 = vmatprep.subr.bf16.mxu0 0
        %599 = vmatpush1.bf16.msra.mxu0 %v576
        %600 = vmatprep.subr.bf16.mxu0 0
        %601 = vmatpush2.bf16.msra.mxu0 0
        %602 = vmatprep.subr.bf16.mxu0 0
        %603 = vmatpush2.bf16.msra.mxu0 0
        %604 = vmatprep.subr.bf16.mxu0 0
        %605 = vmatpush2.bf16.msra.mxu0 0
        %606 = vmatprep.subr.bf16.mxu0 0
        %607 = vmatpush2.bf16.msra.mxu0 0
        %608 = vmatprep.subr.bf16.mxu0 0
        %609 = vmatpush2.bf16.msra.mxu0 0
        %610 = vmatprep.subr.bf16.mxu0 0
        %611 = vmatpush2.bf16.msra.mxu0 0
        %612 = vmatprep.subr.bf16.mxu0 0
        %613 = vmatpush2.bf16.msra.mxu0 0
        %614 = vmatprep.subr.bf16.mxu0 0
        %615 = vmatpush2.bf16.msra.mxu0 0
        %616 = vmatprep.mubr.bf16.mxu0 0
        %617 = vmatmul.mubr.bf16.gmra.mxu0 %v582
        %v618 = vpop.f32.mrf.mxu0
        %v619 = vadd.f32 0.0, %v618
        %v620 = vpop.f32.mrf.mxu0
        %v621 = vpop.f32.mrf.mxu0
        %v622 = vpop.f32.mrf.mxu0
        %623 = vdwg.mxu0
        %v624 = vld [vmem:[%s3] sm:$0xff]
        %626 = vrot.lane.b32.xlu0 %v619, 96
        %v627 = vpop.permute.xlu0 %626
        %vm628 = vcmask 64512
        %v629 = vsel %vm628, %v627, 0
        %631 = vmatprep.subr.mxu0 0.0
        %632 = vmatpush1.msra.mxu0 0.0
        %633 = vmatprep.subr.mxu0 0.0
        %634 = vmatpush1.msra.mxu0 0.0
        %635 = vmatprep.subr.mxu0 0.0
        %636 = vmatpush1.msra.mxu0 0.0
        %637 = vmatprep.subr.mxu0 0.0
        %638 = vmatpush1.msra.mxu0 0.0
        %639 = vmatprep.subr.mxu0 0.0
        %640 = vmatpush1.msra.mxu0 0.0
        %641 = vmatprep.subr.mxu0 0.0
        %642 = vmatpush1.msra.mxu0 0.0
        %643 = vmatprep.subr.mxu0 0.0
        %644 = vmatpush1.msra.mxu0 0.0
        %645 = vmatprep.subr.mxu0 0.0
        %646 = vmatpush1.msra.mxu0 0.0
        %647 = vmatprep.subr.mxu0 0.0
        %648 = vmatpush1.msra.mxu0 0.0
        %649 = vmatprep.subr.mxu0 0.0
        %650 = vmatpush1.msra.mxu0 0.0
        %651 = vmatprep.subr.mxu0 0.0
        %652 = vmatpush1.msra.mxu0 0.0
        %653 = vmatprep.subr.mxu0 0.0
        %654 = vmatpush1.msra.mxu0 0.0
        %655 = vmatprep.subr.mxu0 0.0
        %656 = vmatpush1.msra.mxu0 0.0
        %657 = vmatprep.subr.mxu0 0.0
        %658 = vmatpush1.msra.mxu0 0.0
        %659 = vmatprep.subr.mxu0 0.0
        %660 = vmatpush1.msra.mxu0 0.0
        %661 = vmatprep.subr.mxu0 0.0
        %662 = vmatpush1.msra.mxu0 %v624
        %663 = vmatprep.subr.mxu0 0.0
        %664 = vmatpush2.msra.mxu0 0.0
        %665 = vmatprep.subr.mxu0 0.0
        %666 = vmatpush2.msra.mxu0 0.0
        %667 = vmatprep.subr.mxu0 0.0
        %668 = vmatpush2.msra.mxu0 0.0
        %669 = vmatprep.subr.mxu0 0.0
        %670 = vmatpush2.msra.mxu0 0.0
        %671 = vmatprep.subr.mxu0 0.0
        %672 = vmatpush2.msra.mxu0 0.0
        %673 = vmatprep.subr.mxu0 0.0
        %674 = vmatpush2.msra.mxu0 0.0
        %675 = vmatprep.subr.mxu0 0.0
        %676 = vmatpush2.msra.mxu0 0.0
        %677 = vmatprep.subr.mxu0 0.0
        %678 = vmatpush2.msra.mxu0 0.0
        %679 = vmatprep.subr.mxu0 0.0
        %680 = vmatpush2.msra.mxu0 0.0
        %681 = vmatprep.subr.mxu0 0.0
        %682 = vmatpush2.msra.mxu0 0.0
        %683 = vmatprep.subr.mxu0 0.0
        %684 = vmatpush2.msra.mxu0 0.0
        %685 = vmatprep.subr.mxu0 0.0
        %686 = vmatpush2.msra.mxu0 0.0
        %687 = vmatprep.subr.mxu0 0.0
        %688 = vmatpush2.msra.mxu0 0.0
        %689 = vmatprep.subr.mxu0 0.0
        %690 = vmatpush2.msra.mxu0 0.0
        %691 = vmatprep.subr.mxu0 0.0
        %692 = vmatpush2.msra.mxu0 0.0
        %693 = vmatprep.subr.mxu0 0.0
        %694 = vmatpush2.msra.mxu0 0.0
        %695 = vmatprep.mubr.f32.mxu0 0.0
        %696 = vmatmul.mubr.f32.gmra.mxu0 %v629
        %v697 = vpop.f32.mrf.mxu0
        %v698 = vadd.f32 0.0, %v697
        %v699 = vpop.f32.mrf.mxu0
        %700 = vdwg.mxu0
        %v701 = vld [vmem:[%s5] sm:$0xff]
        %v702 = vmul.f32 %v698, %v701
        %vm703 = vcmask 523264
        %v704 = vsel %vm703, %v702, 0.0
        %v705 = vrot.slane %v704, 4
        %v706 = vadd.f32 %v704, %v705
        %v707 = vrot.slane %v706, 2
        %v708 = vadd.f32 %v706, %v707
        %v709 = vrot.slane %v708, 1
        %v710 = vadd.f32 %v708, %v709
        %711 = vrot.lane.b32.xlu0 %v619, 88
        %v712 = vpop.permute.xlu0 %711
        %v713 = vsel %vm628, %v712, 0
        %715 = vmatprep.subr.mxu0 0.0
        %716 = vmatpush1.msra.mxu0 0.0
        %717 = vmatprep.subr.mxu0 0.0
        %718 = vmatpush1.msra.mxu0 0.0
        %719 = vmatprep.subr.mxu0 0.0
        %720 = vmatpush1.msra.mxu0 0.0
        %721 = vmatprep.subr.mxu0 0.0
        %722 = vmatpush1.msra.mxu0 0.0
        %723 = vmatprep.subr.mxu0 0.0
        %724 = vmatpush1.msra.mxu0 0.0
        %725 = vmatprep.subr.mxu0 0.0
        %726 = vmatpush1.msra.mxu0 0.0
        %727 = vmatprep.subr.mxu0 0.0
        %728 = vmatpush1.msra.mxu0 0.0
        %729 = vmatprep.subr.mxu0 0.0
        %730 = vmatpush1.msra.mxu0 0.0
        %731 = vmatprep.subr.mxu0 0.0
        %732 = vmatpush1.msra.mxu0 0.0
        %733 = vmatprep.subr.mxu0 0.0
        %734 = vmatpush1.msra.mxu0 0.0
        %735 = vmatprep.subr.mxu0 0.0
        %736 = vmatpush1.msra.mxu0 0.0
        %737 = vmatprep.subr.mxu0 0.0
        %738 = vmatpush1.msra.mxu0 0.0
        %739 = vmatprep.subr.mxu0 0.0
        %740 = vmatpush1.msra.mxu0 0.0
        %741 = vmatprep.subr.mxu0 0.0
        %742 = vmatpush1.msra.mxu0 0.0
        %743 = vmatprep.subr.mxu0 0.0
        %744 = vmatpush1.msra.mxu0 0.0
        %745 = vmatprep.subr.mxu0 0.0
        %746 = vmatpush1.msra.mxu0 %v624
        %747 = vmatprep.subr.mxu0 0.0
        %748 = vmatpush2.msra.mxu0 0.0
        %749 = vmatprep.subr.mxu0 0.0
        %750 = vmatpush2.msra.mxu0 0.0
        %751 = vmatprep.subr.mxu0 0.0
        %752 = vmatpush2.msra.mxu0 0.0
        %753 = vmatprep.subr.mxu0 0.0
        %754 = vmatpush2.msra.mxu0 0.0
        %755 = vmatprep.subr.mxu0 0.0
        %756 = vmatpush2.msra.mxu0 0.0
        %757 = vmatprep.subr.mxu0 0.0
        %758 = vmatpush2.msra.mxu0 0.0
        %759 = vmatprep.subr.mxu0 0.0
        %760 = vmatpush2.msra.mxu0 0.0
        %761 = vmatprep.subr.mxu0 0.0
        %762 = vmatpush2.msra.mxu0 0.0
        %763 = vmatprep.subr.mxu0 0.0
        %764 = vmatpush2.msra.mxu0 0.0
        %765 = vmatprep.subr.mxu0 0.0
        %766 = vmatpush2.msra.mxu0 0.0
        %767 = vmatprep.subr.mxu0 0.0
        %768 = vmatpush2.msra.mxu0 0.0
        %769 = vmatprep.subr.mxu0 0.0
        %770 = vmatpush2.msra.mxu0 0.0
        %771 = vmatprep.subr.mxu0 0.0
        %772 = vmatpush2.msra.mxu0 0.0
        %773 = vmatprep.subr.mxu0 0.0
        %774 = vmatpush2.msra.mxu0 0.0
        %775 = vmatprep.subr.mxu0 0.0
        %776 = vmatpush2.msra.mxu0 0.0
        %777 = vmatprep.subr.mxu0 0.0
        %778 = vmatpush2.msra.mxu0 0.0
        %779 = vmatprep.mubr.f32.mxu0 0.0
        %780 = vmatmul.mubr.f32.gmra.mxu0 %v713
        %v781 = vpop.f32.mrf.mxu0
        %v782 = vadd.f32 %v710, %v781
        %v783 = vpop.f32.mrf.mxu0
        %784 = vdwg.mxu0
        %vm785 = vcmp.gt.f32.partialorder %v782, 0.0
        %v786 = vmul.f32 %v782, 0.2
        %v787 = vsel %vm785, %v782, %v786
        %v788 = vld [vmem:[%s560] sm:$0xff]
        %v789 = vadd.f32 %v787, %v788
        %v790 = vsel %vm703, %v789, -inf
        %791 = vmax.xlane.f32.xlu0 %v790
        %v792 = vpop.xlane.xlu0 %791
        %v793 = vsub.f32 %v789, %v792
        %v794 = vmul.f32 %v793, 1.442695
        %v795 = vpow.pop %v794
        %v796 = vld [vmem:[%s4] sm:$0xff]
        %v797 = vld [vmem:[%s4 + $0x8] sm:$0xff]
        %v798 = vld [vmem:[%s4 + $0x10] sm:$0xff]
        %v799 = vld [vmem:[%s4 + $0x18] sm:$0xff]
        %v800 = vld [vmem:[%s4 + $0x20] sm:$0xff]
        %v801 = vld [vmem:[%s4 + $0x28] sm:$0xff]
        %v802 = vld [vmem:[%s4 + $0x30] sm:$0xff]
        %v803 = vld [vmem:[%s4 + $0x38] sm:$0xff]
        %v805 = vsel %vm703, %v795, 0
        %807 = vmatprep.subr.mxu0 0.0
        %808 = vmatpush1.msra.mxu0 0.0
        %809 = vmatprep.subr.mxu0 0.0
        %810 = vmatpush1.msra.mxu0 0.0
        %811 = vmatprep.subr.mxu0 0.0
        %812 = vmatpush1.msra.mxu0 0.0
        %813 = vmatprep.subr.mxu0 0.0
        %814 = vmatpush1.msra.mxu0 0.0
        %815 = vmatprep.subr.mxu0 0.0
        %816 = vmatpush1.msra.mxu0 0.0
        %817 = vmatprep.subr.mxu0 0.0
        %818 = vmatpush1.msra.mxu0 0.0
        %819 = vmatprep.subr.mxu0 0.0
        %820 = vmatpush1.msra.mxu0 0.0
        %821 = vmatprep.subr.mxu0 0.0
        %822 = vmatpush1.msra.mxu0 0.0
        %823 = vmatprep.subr.mxu0 0.0
        %824 = vmatpush1.msra.mxu0 %v803
        %825 = vmatprep.subr.mxu0 0.0
        %826 = vmatpush1.msra.mxu0 %v802
        %827 = vmatprep.subr.mxu0 0.0
        %828 = vmatpush1.msra.mxu0 %v801
        %829 = vmatprep.subr.mxu0 0.0
        %830 = vmatpush1.msra.mxu0 %v800
        %831 = vmatprep.subr.mxu0 0.0
        %832 = vmatpush1.msra.mxu0 %v799
        %833 = vmatprep.subr.mxu0 0.0
        %834 = vmatpush1.msra.mxu0 %v798
        %835 = vmatprep.subr.mxu0 0.0
        %836 = vmatpush1.msra.mxu0 %v797
        %837 = vmatprep.subr.mxu0 0.0
        %838 = vmatpush1.msra.mxu0 %v796
        %839 = vmatprep.subr.mxu0 0.0
        %840 = vmatpush2.msra.mxu0 0.0
        %841 = vmatprep.subr.mxu0 0.0
        %842 = vmatpush2.msra.mxu0 0.0
        %843 = vmatprep.subr.mxu0 0.0
        %844 = vmatpush2.msra.mxu0 0.0
        %845 = vmatprep.subr.mxu0 0.0
        %846 = vmatpush2.msra.mxu0 0.0
        %847 = vmatprep.subr.mxu0 0.0
        %848 = vmatpush2.msra.mxu0 0.0
        %849 = vmatprep.subr.mxu0 0.0
        %850 = vmatpush2.msra.mxu0 0.0
        %851 = vmatprep.subr.mxu0 0.0
        %852 = vmatpush2.msra.mxu0 0.0
        %853 = vmatprep.subr.mxu0 0.0
        %854 = vmatpush2.msra.mxu0 0.0
        %855 = vmatprep.subr.mxu0 0.0
        %856 = vmatpush2.msra.mxu0 0.0
        %857 = vmatprep.subr.mxu0 0.0
        %858 = vmatpush2.msra.mxu0 0.0
        %859 = vmatprep.subr.mxu0 0.0
        %860 = vmatpush2.msra.mxu0 0.0
        %861 = vmatprep.subr.mxu0 0.0
        %862 = vmatpush2.msra.mxu0 0.0
        %863 = vmatprep.subr.mxu0 0.0
        %864 = vmatpush2.msra.mxu0 0.0
        %865 = vmatprep.subr.mxu0 0.0
        %866 = vmatpush2.msra.mxu0 0.0
        %867 = vmatprep.subr.mxu0 0.0
        %868 = vmatpush2.msra.mxu0 0.0
        %869 = vmatprep.subr.mxu0 0.0
        %870 = vmatpush2.msra.mxu0 0.0
        %871 = vmatprep.mubr.f32.mxu0 0.0
        %872 = vmatmul.mubr.f32.gmra.mxu0 %v805
        %v873 = vpop.f32.mrf.mxu0
        %v874 = vadd.f32 0.0, %v873
        %v875 = vpop.f32.mrf.mxu0
        %876 = vdwg.mxu0
        %v877 = vrcp.pop %v874
        %v879 = vsel %vm628, %v877, 0
        %881 = vmatprep.subr.mxu0 0.0
        %882 = vmatpush1.msra.mxu0 0.0
        %883 = vmatprep.subr.mxu0 0.0
        %884 = vmatpush1.msra.mxu0 0.0
        %885 = vmatprep.subr.mxu0 0.0
        %886 = vmatpush1.msra.mxu0 0.0
        %887 = vmatprep.subr.mxu0 0.0
        %888 = vmatpush1.msra.mxu0 0.0
        %889 = vmatprep.subr.mxu0 0.0
        %890 = vmatpush1.msra.mxu0 0.0
        %891 = vmatprep.subr.mxu0 0.0
        %892 = vmatpush1.msra.mxu0 0.0
        %893 = vmatprep.subr.mxu0 0.0
        %894 = vmatpush1.msra.mxu0 0.0
        %895 = vmatprep.subr.mxu0 0.0
        %896 = vmatpush1.msra.mxu0 0.0
        %897 = vmatprep.subr.mxu0 0.0
        %898 = vmatpush1.msra.mxu0 0.0
        %899 = vmatprep.subr.mxu0 0.0
        %900 = vmatpush1.msra.mxu0 0.0
        %901 = vmatprep.subr.mxu0 0.0
        %902 = vmatpush1.msra.mxu0 0.0
        %903 = vmatprep.subr.mxu0 0.0
        %904 = vmatpush1.msra.mxu0 0.0
        %905 = vmatprep.subr.mxu0 0.0
        %906 = vmatpush1.msra.mxu0 0.0
        %907 = vmatprep.subr.mxu0 0.0
        %908 = vmatpush1.msra.mxu0 0.0
        %909 = vmatprep.subr.mxu0 0.0
        %910 = vmatpush1.msra.mxu0 0.0
        %911 = vmatprep.subr.mxu0 0.0
        %912 = vmatpush1.msra.mxu0 %v624
        %913 = vmatprep.subr.mxu0 0.0
        %914 = vmatpush2.msra.mxu0 0.0
        %915 = vmatprep.subr.mxu0 0.0
        %916 = vmatpush2.msra.mxu0 0.0
        %917 = vmatprep.subr.mxu0 0.0
        %918 = vmatpush2.msra.mxu0 0.0
        %919 = vmatprep.subr.mxu0 0.0
        %920 = vmatpush2.msra.mxu0 0.0
        %921 = vmatprep.subr.mxu0 0.0
        %922 = vmatpush2.msra.mxu0 0.0
        %923 = vmatprep.subr.mxu0 0.0
        %924 = vmatpush2.msra.mxu0 0.0
        %925 = vmatprep.subr.mxu0 0.0
        %926 = vmatpush2.msra.mxu0 0.0
        %927 = vmatprep.subr.mxu0 0.0
        %928 = vmatpush2.msra.mxu0 0.0
        %929 = vmatprep.subr.mxu0 0.0
        %930 = vmatpush2.msra.mxu0 0.0
        %931 = vmatprep.subr.mxu0 0.0
        %932 = vmatpush2.msra.mxu0 0.0
        %933 = vmatprep.subr.mxu0 0.0
        %934 = vmatpush2.msra.mxu0 0.0
        %935 = vmatprep.subr.mxu0 0.0
        %936 = vmatpush2.msra.mxu0 0.0
        %937 = vmatprep.subr.mxu0 0.0
        %938 = vmatpush2.msra.mxu0 0.0
        %939 = vmatprep.subr.mxu0 0.0
        %940 = vmatpush2.msra.mxu0 0.0
        %941 = vmatprep.subr.mxu0 0.0
        %942 = vmatpush2.msra.mxu0 0.0
        %943 = vmatprep.subr.mxu0 0.0
        %944 = vmatpush2.msra.mxu0 0.0
        %945 = vmatprep.mubr.f32.mxu0 0.0
        %946 = vmatmul.mubr.f32.gmra.mxu0 %v879
        %v947 = vpop.f32.mrf.mxu0
        %v948 = vadd.f32 0.0, %v947
        %v949 = vpop.f32.mrf.mxu0
        %950 = vdwg.mxu0
        %v951 = vmul.f32 %v795, %v948
        %v952 = vld [vmem:[%s6] sm:$0xff]
        %v953 = vld [vmem:[%s6 + $0x8] sm:$0xff]
        %v954 = vld [vmem:[%s6 + $0x10] sm:$0xff]
        %v955 = vld [vmem:[%s6 + $0x18] sm:$0xff]
        %v956 = vld [vmem:[%s6 + $0x20] sm:$0xff]
        %v957 = vld [vmem:[%s6 + $0x28] sm:$0xff]
        %v958 = vld [vmem:[%s6 + $0x30] sm:$0xff]
        %v959 = vld [vmem:[%s6 + $0x38] sm:$0xff]
        %v961 = vsel %vm628, %v952, 0
        %v964 = vsel %vm628, %v953, 0
        %v967 = vsel %vm628, %v954, 0
        %v970 = vsel %vm628, %v955, 0
        %v973 = vsel %vm628, %v956, 0
        %v976 = vsel %vm628, %v957, 0
        %v979 = vsel %vm628, %v958, 0
        %v982 = vsel %vm628, %v959, 0
        %984 = vmatprep.subr.mxu0 0.0
        %985 = vmatpush1.msra.mxu0 0.0
        %986 = vmatprep.subr.mxu0 0.0
        %987 = vmatpush1.msra.mxu0 0.0
        %988 = vmatprep.subr.mxu0 0.0
        %989 = vmatpush1.msra.mxu0 0.0
        %990 = vmatprep.subr.mxu0 0.0
        %991 = vmatpush1.msra.mxu0 0.0
        %992 = vmatprep.subr.mxu0 0.0
        %993 = vmatpush1.msra.mxu0 0.0
        %994 = vmatprep.subr.mxu0 0.0
        %995 = vmatpush1.msra.mxu0 0.0
        %996 = vmatprep.subr.mxu0 0.0
        %997 = vmatpush1.msra.mxu0 0.0
        %998 = vmatprep.subr.mxu0 0.0
        %999 = vmatpush1.msra.mxu0 0.0
        %1000 = vmatprep.subr.mxu0 0.0
        %1001 = vmatpush1.msra.mxu0 0.0
        %1002 = vmatprep.subr.mxu0 0.0
        %1003 = vmatpush1.msra.mxu0 0.0
        %1004 = vmatprep.subr.mxu0 0.0
        %1005 = vmatpush1.msra.mxu0 0.0
        %1006 = vmatprep.subr.mxu0 0.0
        %1007 = vmatpush1.msra.mxu0 0.0
        %1008 = vmatprep.subr.mxu0 0.0
        %1009 = vmatpush1.msra.mxu0 0.0
        %1010 = vmatprep.subr.mxu0 0.0
        %1011 = vmatpush1.msra.mxu0 0.0
        %1012 = vmatprep.subr.mxu0 0.0
        %1013 = vmatpush1.msra.mxu0 0.0
        %1014 = vmatprep.subr.mxu0 0.0
        %1015 = vmatpush1.msra.mxu0 %v619
        %1016 = vmatprep.subr.mxu0 0.0
        %1017 = vmatpush2.msra.mxu0 0.0
        %1018 = vmatprep.subr.mxu0 0.0
        %1019 = vmatpush2.msra.mxu0 0.0
        %1020 = vmatprep.subr.mxu0 0.0
        %1021 = vmatpush2.msra.mxu0 0.0
        %1022 = vmatprep.subr.mxu0 0.0
        %1023 = vmatpush2.msra.mxu0 0.0
        %1024 = vmatprep.subr.mxu0 0.0
        %1025 = vmatpush2.msra.mxu0 0.0
        %1026 = vmatprep.subr.mxu0 0.0
        %1027 = vmatpush2.msra.mxu0 0.0
        %1028 = vmatprep.subr.mxu0 0.0
        %1029 = vmatpush2.msra.mxu0 0.0
        %1030 = vmatprep.subr.mxu0 0.0
        %1031 = vmatpush2.msra.mxu0 0.0
        %1032 = vmatprep.subr.mxu0 0.0
        %1033 = vmatpush2.msra.mxu0 0.0
        %1034 = vmatprep.subr.mxu0 0.0
        %1035 = vmatpush2.msra.mxu0 0.0
        %1036 = vmatprep.subr.mxu0 0.0
        %1037 = vmatpush2.msra.mxu0 0.0
        %1038 = vmatprep.subr.mxu0 0.0
        %1039 = vmatpush2.msra.mxu0 0.0
        %1040 = vmatprep.subr.mxu0 0.0
        %1041 = vmatpush2.msra.mxu0 0.0
        %1042 = vmatprep.subr.mxu0 0.0
        %1043 = vmatpush2.msra.mxu0 0.0
        %1044 = vmatprep.subr.mxu0 0.0
        %1045 = vmatpush2.msra.mxu0 0.0
        %1046 = vmatprep.subr.mxu0 0.0
        %1047 = vmatpush2.msra.mxu0 0.0
        %1048 = vmatprep.mubr.f32.mxu0 0.0
        %1049 = vmatmul.mubr.f32.gmra.mxu0 %v961
        %v1050 = vpop.f32.mrf.mxu0
        %v1051 = vadd.f32 0.0, %v1050
        %v1052 = vpop.f32.mrf.mxu0
        %1053 = vmatprep.mubr.f32.mxu0 0.0
        %1054 = vmatmul.mubr.f32.gmra.mxu0 %v964
        %v1055 = vpop.f32.mrf.mxu0
        %v1056 = vadd.f32 0.0, %v1055
        %v1057 = vpop.f32.mrf.mxu0
        %1058 = vmatprep.mubr.f32.mxu0 0.0
        %1059 = vmatmul.mubr.f32.gmra.mxu0 %v967
        %v1060 = vpop.f32.mrf.mxu0
        %v1061 = vadd.f32 0.0, %v1060
        %v1062 = vpop.f32.mrf.mxu0
        %1063 = vmatprep.mubr.f32.mxu0 0.0
        %1064 = vmatmul.mubr.f32.gmra.mxu0 %v970
        %v1065 = vpop.f32.mrf.mxu0
        %v1066 = vadd.f32 0.0, %v1065
        %v1067 = vpop.f32.mrf.mxu0
        %1068 = vmatprep.mubr.f32.mxu0 0.0
        %1069 = vmatmul.mubr.f32.gmra.mxu0 %v973
        %v1070 = vpop.f32.mrf.mxu0
        %v1071 = vadd.f32 0.0, %v1070
        %v1072 = vpop.f32.mrf.mxu0
        %1073 = vmatprep.mubr.f32.mxu0 0.0
        %1074 = vmatmul.mubr.f32.gmra.mxu0 %v976
        %v1075 = vpop.f32.mrf.mxu0
        %v1076 = vadd.f32 0.0, %v1075
        %v1077 = vpop.f32.mrf.mxu0
        %1078 = vmatprep.mubr.f32.mxu0 0.0
        %1079 = vmatmul.mubr.f32.gmra.mxu0 %v979
        %v1080 = vpop.f32.mrf.mxu0
        %v1081 = vadd.f32 0.0, %v1080
        %v1082 = vpop.f32.mrf.mxu0
        %1083 = vmatprep.mubr.f32.mxu0 0.0
        %1084 = vmatmul.mubr.f32.gmra.mxu0 %v982
        %v1085 = vpop.f32.mrf.mxu0
        %v1086 = vadd.f32 0.0, %v1085
        %v1087 = vpop.f32.mrf.mxu0
        %1088 = vdwg.mxu0
        %v1089 = vld [vmem:[%s7] sm:$0xff]
        %v1090 = vld [vmem:[%s7 + $0x8] sm:$0xff]
        %v1091 = vld [vmem:[%s7 + $0x10] sm:$0xff]
        %v1092 = vld [vmem:[%s7 + $0x18] sm:$0xff]
        %v1093 = vld [vmem:[%s7 + $0x20] sm:$0xff]
        %v1094 = vld [vmem:[%s7 + $0x28] sm:$0xff]
        %v1095 = vld [vmem:[%s7 + $0x30] sm:$0xff]
        %v1096 = vld [vmem:[%s7 + $0x38] sm:$0xff]
        %v1097 = vmul.f32 %v1051, %v1089
        %v1098 = vmul.f32 %v1056, %v1090
        %v1099 = vmul.f32 %v1061, %v1091
        %v1100 = vmul.f32 %v1066, %v1092
        %v1101 = vmul.f32 %v1071, %v1093
        %v1102 = vmul.f32 %v1076, %v1094
        %v1103 = vmul.f32 %v1081, %v1095
        %v1104 = vmul.f32 %v1086, %v1096
        %v1105 = vpack.c.bf16 %v1098, %v1097
        %v1106 = vpack.c.bf16 %v1100, %v1099
        %v1107 = vpack.c.bf16 %v1102, %v1101
        %v1108 = vpack.c.bf16 %v1104, %v1103
        %v1109 = vpack.c.bf16 %v951, %v951
        %v1110 = vld [vmem:[%s8] sm:$0x1]
        %v1112 = vlaneseq
        %v1113 = vshrl.u32 %v1112, 7
        %v1114 = vsub.s32 0, %v1113
        %v1115 = vrot.slane %v1110, %v1114
        %v1118 = vsel %vm703, %v1109, 0
        %1120 = vmatprep.subr.bf16.mxu0 0
        %1121 = vmatpush1.bf16.msra.mxu0 0
        %1122 = vmatprep.subr.bf16.mxu0 0
        %1123 = vmatpush1.bf16.msra.mxu0 0
        %1124 = vmatprep.subr.bf16.mxu0 0
        %1125 = vmatpush1.bf16.msra.mxu0 0
        %1126 = vmatprep.subr.bf16.mxu0 0
        %1127 = vmatpush1.bf16.msra.mxu0 0
        %1128 = vmatprep.subr.bf16.mxu0 0
        %1129 = vmatpush1.bf16.msra.mxu0 %v1108
        %1130 = vmatprep.subr.bf16.mxu0 0
        %1131 = vmatpush1.bf16.msra.mxu0 %v1107
        %1132 = vmatprep.subr.bf16.mxu0 0
        %1133 = vmatpush1.bf16.msra.mxu0 %v1106
        %1134 = vmatprep.subr.bf16.mxu0 0
        %1135 = vmatpush1.bf16.msra.mxu0 %v1105
        %1136 = vmatprep.subr.bf16.mxu0 0
        %1137 = vmatpush2.bf16.msra.mxu0 0
        %1138 = vmatprep.subr.bf16.mxu0 0
        %1139 = vmatpush2.bf16.msra.mxu0 0
        %1140 = vmatprep.subr.bf16.mxu0 0
        %1141 = vmatpush2.bf16.msra.mxu0 0
        %1142 = vmatprep.subr.bf16.mxu0 0
        %1143 = vmatpush2.bf16.msra.mxu0 0
        %1144 = vmatprep.subr.bf16.mxu0 0
        %1145 = vmatpush2.bf16.msra.mxu0 0
        %1146 = vmatprep.subr.bf16.mxu0 0
        %1147 = vmatpush2.bf16.msra.mxu0 0
        %1148 = vmatprep.subr.bf16.mxu0 0
        %1149 = vmatpush2.bf16.msra.mxu0 0
        %1150 = vmatprep.subr.bf16.mxu0 0
        %1151 = vmatpush2.bf16.msra.mxu0 0
        %1152 = vmatprep.mubr.bf16.mxu0 0
        %1153 = vmatmul.mubr.bf16.gmra.mxu0 %v1118
        %v1154 = vpop.f32.mrf.mxu0
        %v1155 = vadd.f32 %v1115, %v1154
        %v1156 = vpop.f32.mrf.mxu0
        %v1157 = vpop.f32.mrf.mxu0
        %v1158 = vpop.f32.mrf.mxu0
        %1159 = vdwg.mxu0
        %v1160 = vadd.f32 %v1155, %v562
        %v1161 = vld [vmem:[%s13] sm:$0x1]
        %v1162 = vld [vmem:[%s14] sm:$0x1]
        %v1163 = vsel %vm580, %v1160, 0.0
        %1164 = vadd.xlane.f32.xlu0 %v1163
        %v1165 = vpop.xlane.xlu0 %1164
        %v1166 = vrcp.pop 32.0
        %v1167 = vmul.f32 %v1165, %v1166
        %v1168 = vsub.f32 %v1160, %v1167
        %v1169 = vmul.f32 %v1168, %v1168
        %v1170 = vsel %vm580, %v1169, 0.0
        %1171 = vadd.xlane.f32.xlu0 %v1170
        %v1172 = vpop.xlane.xlu0 %1171
        %v1173 = vmul.f32 %v1172, %v1166
        %v1174 = vadd.f32 %v1173, 1e-05
        %v1175 = vrsqrt.pop %v1174
        %v1176 = vmul.f32 %v1168, %v1175
        %v1178 = vlaneseq
        %v1179 = vshrl.u32 %v1178, 7
        %v1180 = vsub.s32 0, %v1179
        %v1181 = vrot.slane %v1161, %v1180
        %v1183 = vmul.f32 %v1176, %v1181
        %v1185 = vlaneseq
        %v1186 = vshrl.u32 %v1185, 7
        %v1187 = vsub.s32 0, %v1186
        %v1188 = vrot.slane %v1162, %v1187
        %v1190 = vadd.f32 %v1183, %v1188
        %v1191 = vpack.c.bf16 %v1190, %v1190
        %v1192 = vld [vmem:[%s9] sm:$0xf]
        %v1193 = vld [vmem:[%s9 + $0x4] sm:$0xf]
        %v1194 = vld [vmem:[%s9 + $0x8] sm:$0xf]
        %v1195 = vld [vmem:[%s9 + $0xc] sm:$0xf]
        %v1196 = vld [vmem:[%s10] sm:$0x1]
        %v1198 = vlaneseq
        %v1199 = vshrl.u32 %v1198, 7
        %v1200 = vsub.s32 0, %v1199
        %v1201 = vrot.slane %v1196, %v1200
        %v1207 = vunpack.c.l.b16 %v1192
        %v1208 = vunpack.c.l.b16 %v1193
        %v1209 = vunpack.c.l.b16 %v1194
        %v1210 = vunpack.c.l.b16 %v1195
        %v1211 = vpack.c.b16 %v1208, %v1207
        %v1212 = vpack.c.b16 %v1210, %v1209
        %v1216 = vsel %vm580, %v1191, 0
        %1218 = vmatprep.subr.bf16.mxu0 0
        %1219 = vmatpush1.bf16.msra.mxu0 0
        %1220 = vmatprep.subr.bf16.mxu0 0
        %1221 = vmatpush1.bf16.msra.mxu0 0
        %1222 = vmatprep.subr.bf16.mxu0 0
        %1223 = vmatpush1.bf16.msra.mxu0 0
        %1224 = vmatprep.subr.bf16.mxu0 0
        %1225 = vmatpush1.bf16.msra.mxu0 0
        %1226 = vmatprep.subr.bf16.mxu0 0
        %1227 = vmatpush1.bf16.msra.mxu0 0
        %1228 = vmatprep.subr.bf16.mxu0 0
        %1229 = vmatpush1.bf16.msra.mxu0 0
        %1230 = vmatprep.subr.bf16.mxu0 0
        %1231 = vmatpush1.bf16.msra.mxu0 %v1212
        %1232 = vmatprep.subr.bf16.mxu0 0
        %1233 = vmatpush1.bf16.msra.mxu0 %v1211
        %1234 = vmatprep.subr.bf16.mxu0 0
        %1235 = vmatpush2.bf16.msra.mxu0 0
        %1236 = vmatprep.subr.bf16.mxu0 0
        %1237 = vmatpush2.bf16.msra.mxu0 0
        %1238 = vmatprep.subr.bf16.mxu0 0
        %1239 = vmatpush2.bf16.msra.mxu0 0
        %1240 = vmatprep.subr.bf16.mxu0 0
        %1241 = vmatpush2.bf16.msra.mxu0 0
        %1242 = vmatprep.subr.bf16.mxu0 0
        %1243 = vmatpush2.bf16.msra.mxu0 0
        %1244 = vmatprep.subr.bf16.mxu0 0
        %1245 = vmatpush2.bf16.msra.mxu0 0
        %1246 = vmatprep.subr.bf16.mxu0 0
        %1247 = vmatpush2.bf16.msra.mxu0 0
        %1248 = vmatprep.subr.bf16.mxu0 0
        %1249 = vmatpush2.bf16.msra.mxu0 0
        %1250 = vmatprep.mubr.bf16.mxu0 0
        %1251 = vmatmul.mubr.bf16.gmra.mxu0 %v1216
        %v1252 = vpop.f32.mrf.mxu0
        %v1253 = vadd.f32 %v1201, %v1252
        %v1254 = vpop.f32.mrf.mxu0
        %v1255 = vpop.f32.mrf.mxu0
        %v1256 = vpop.f32.mrf.mxu0
        %1257 = vdwg.mxu0
        %v1258 = vmax.f32 %v1253, 0.0
        %v1259 = vpack.c.bf16 %v1258, %v1258
        %v1260 = vld [vmem:[%s11] sm:$0xf]
        %v1261 = vld [vmem:[%s11 + $0x4] sm:$0xf]
        %v1262 = vld [vmem:[%s11 + $0x8] sm:$0xf]
        %v1263 = vld [vmem:[%s11 + $0xc] sm:$0xf]
        %v1264 = vld [vmem:[%s11 + $0x10] sm:$0xf]
        %v1265 = vld [vmem:[%s11 + $0x14] sm:$0xf]
        %v1266 = vld [vmem:[%s11 + $0x18] sm:$0xf]
        %v1267 = vld [vmem:[%s11 + $0x1c] sm:$0xf]
        %v1268 = vld [vmem:[%s11 + $0x20] sm:$0xf]
        %v1269 = vld [vmem:[%s11 + $0x24] sm:$0xf]
        %v1270 = vld [vmem:[%s11 + $0x28] sm:$0xf]
        %v1271 = vld [vmem:[%s11 + $0x2c] sm:$0xf]
        %v1272 = vld [vmem:[%s11 + $0x30] sm:$0xf]
        %v1273 = vld [vmem:[%s11 + $0x34] sm:$0xf]
        %v1274 = vld [vmem:[%s11 + $0x38] sm:$0xf]
        %v1275 = vld [vmem:[%s11 + $0x3c] sm:$0xf]
        %v1276 = vld [vmem:[%s12] sm:$0x1]
        %v1278 = vlaneseq
        %v1279 = vshrl.u32 %v1278, 7
        %v1280 = vsub.s32 0, %v1279
        %v1281 = vrot.slane %v1276, %v1280
        %v1299 = vunpack.c.l.b16 %v1260
        %v1300 = vunpack.c.l.b16 %v1261
        %v1301 = vunpack.c.l.b16 %v1262
        %v1302 = vunpack.c.l.b16 %v1263
        %v1303 = vunpack.c.l.b16 %v1264
        %v1304 = vunpack.c.l.b16 %v1265
        %v1305 = vunpack.c.l.b16 %v1266
        %v1306 = vunpack.c.l.b16 %v1267
        %v1307 = vunpack.c.l.b16 %v1268
        %v1308 = vunpack.c.l.b16 %v1269
        %v1309 = vunpack.c.l.b16 %v1270
        %v1310 = vunpack.c.l.b16 %v1271
        %v1311 = vunpack.c.l.b16 %v1272
        %v1312 = vunpack.c.l.b16 %v1273
        %v1313 = vunpack.c.l.b16 %v1274
        %v1314 = vunpack.c.l.b16 %v1275
        %v1315 = vpack.c.b16 %v1300, %v1299
        %v1316 = vpack.c.b16 %v1302, %v1301
        %v1317 = vpack.c.b16 %v1304, %v1303
        %v1318 = vpack.c.b16 %v1306, %v1305
        %v1319 = vpack.c.b16 %v1308, %v1307
        %v1320 = vpack.c.b16 %v1310, %v1309
        %v1321 = vpack.c.b16 %v1312, %v1311
        %v1322 = vpack.c.b16 %v1314, %v1313
        %1331 = vmatprep.subr.bf16.mxu0 0
        %1332 = vmatpush1.bf16.msra.mxu0 %v1322
        %1333 = vmatprep.subr.bf16.mxu0 0
        %1334 = vmatpush1.bf16.msra.mxu0 %v1321
        %1335 = vmatprep.subr.bf16.mxu0 0
        %1336 = vmatpush1.bf16.msra.mxu0 %v1320
        %1337 = vmatprep.subr.bf16.mxu0 0
        %1338 = vmatpush1.bf16.msra.mxu0 %v1319
        %1339 = vmatprep.subr.bf16.mxu0 0
        %1340 = vmatpush1.bf16.msra.mxu0 %v1318
        %1341 = vmatprep.subr.bf16.mxu0 0
        %1342 = vmatpush1.bf16.msra.mxu0 %v1317
        %1343 = vmatprep.subr.bf16.mxu0 0
        %1344 = vmatpush1.bf16.msra.mxu0 %v1316
        %1345 = vmatprep.subr.bf16.mxu0 0
        %1346 = vmatpush1.bf16.msra.mxu0 %v1315
        %1347 = vmatprep.subr.bf16.mxu0 0
        %1348 = vmatpush2.bf16.msra.mxu0 0
        %1349 = vmatprep.subr.bf16.mxu0 0
        %1350 = vmatpush2.bf16.msra.mxu0 0
        %1351 = vmatprep.subr.bf16.mxu0 0
        %1352 = vmatpush2.bf16.msra.mxu0 0
        %1353 = vmatprep.subr.bf16.mxu0 0
        %1354 = vmatpush2.bf16.msra.mxu0 0
        %1355 = vmatprep.subr.bf16.mxu0 0
        %1356 = vmatpush2.bf16.msra.mxu0 0
        %1357 = vmatprep.subr.bf16.mxu0 0
        %1358 = vmatpush2.bf16.msra.mxu0 0
        %1359 = vmatprep.subr.bf16.mxu0 0
        %1360 = vmatpush2.bf16.msra.mxu0 0
        %1361 = vmatprep.subr.bf16.mxu0 0
        %1362 = vmatpush2.bf16.msra.mxu0 0
        %1363 = vmatprep.mubr.bf16.mxu0 0
        %1364 = vmatmul.mubr.bf16.gmra.mxu0 %v1259
        %v1365 = vpop.f32.mrf.mxu0
        %v1366 = vadd.f32 %v1281, %v1365
        %v1367 = vpop.f32.mrf.mxu0
        %v1368 = vpop.f32.mrf.mxu0
        %v1369 = vpop.f32.mrf.mxu0
        %1370 = vdwg.mxu0
        %v1371 = vadd.f32 %v1366, %v1190
        %v1372 = vld [vmem:[%s15] sm:$0x1]
        %v1373 = vld [vmem:[%s16] sm:$0x1]
        %v1374 = vsel %vm580, %v1371, 0.0
        %1375 = vadd.xlane.f32.xlu0 %v1374
        %v1376 = vpop.xlane.xlu0 %1375
        %v1377 = vmul.f32 %v1376, %v1166
        %v1378 = vsub.f32 %v1371, %v1377
        %v1379 = vmul.f32 %v1378, %v1378
        %v1380 = vsel %vm580, %v1379, 0.0
        %1381 = vadd.xlane.f32.xlu0 %v1380
        %v1382 = vpop.xlane.xlu0 %1381
        %v1383 = vmul.f32 %v1382, %v1166
        %v1384 = vadd.f32 %v1383, 1e-05
        %v1385 = vrsqrt.pop %v1384
        %v1386 = vmul.f32 %v1378, %v1385
        %v1388 = vlaneseq
        %v1389 = vshrl.u32 %v1388, 7
        %v1390 = vsub.s32 0, %v1389
        %v1391 = vrot.slane %v1372, %v1390
        %v1393 = vmul.f32 %v1386, %v1391
        %v1395 = vlaneseq
        %v1396 = vshrl.u32 %v1395, 7
        %v1397 = vsub.s32 0, %v1396
        %v1398 = vrot.slane %v1373, %v1397
        %v1400 = vadd.f32 %v1393, %v1398
        %1401 = vst.msk [vmem:[%s552] sm:$0xff] %vm580, %v1400
        %s1402 = sand.u32 %s406, 1
        %s1403 = scalar_lea.sflag [#allocation3], %s1402
        %s1404 = sand.u32 %s406, 1
        %s1405 = smul.addr %s1404, 8
        %s1406 = scalar_lea.vmem [#allocation2], %s1405
        // Predicated region
        $region89: #{tpu_custom_call.1} parent=87 // pred_check
          %p1407 = pneg %p416
        $region90: #{tpu_custom_call.1} parent=87 // pred_check_branch
          %1409 = sbr.rel (%p1407) target = $region92
        $region91: #{tpu_custom_call.1} parent=87 // pred_region
          %s1411 = ssub.s32 128, 128
          %1412 = vsyncadd %s1403, %s1411
          %s1413 = smul.addr %s31, 128
          %s1414 = scalar_lea.hbm %s17, %s1413
          %s1416 = sshll.u32 %s1406, 4
          %s1417 = int_to_ptr.vmem [resolvable:$true] %s1416
          %1419 = dma.vmem_to_hbm [thread:$0]  %s1417, 128, %s1414, %s1403
        $region92: #{tpu_custom_call.1} parent=87 // pred_fallthru
          _
      $region88: #{tpu_custom_call.1} parent=5 // pred_fallthru
        _
      %p1420 = scmp.le.s32.totalorder 2, %s26
      // Predicated region
      $region93: #{tpu_custom_call.1} parent=5 // pred_check
        %p1421 = pneg %p1420
      $region94: #{tpu_custom_call.1} parent=5 // pred_check_branch
        %1423 = sbr.rel (%p1421) target = $region96
      $region95: #{tpu_custom_call.1} parent=5 // pred_region
        %s1424 = ssub.s32 %s26, 2
        // Predicated region
        $region97: #{tpu_custom_call.1} parent=95 // pred_check
          %p1425 = pneg %p422
        $region98: #{tpu_custom_call.1} parent=95 // pred_check_branch
          %1427 = sbr.rel (%p1425) target = $region100
        $region99: #{tpu_custom_call.1} parent=95 // pred_region
          %s1428 = sand.u32 %s407, 1
          %s1429 = scalar_lea.sflag [#allocation3], %s1428
          %s1430 = sand.u32 %s407, 1
          %s1431 = smul.addr %s1430, 8
          %s1432 = scalar_lea.vmem [#allocation2], %s1431
          %1433 = dma.done %s1429, 128
        $region100: #{tpu_custom_call.1} parent=95 // pred_fallthru
          _
      $region96: #{tpu_custom_call.1} parent=5 // pred_fallthru
        _
    $region6: #{tpu_custom_call.1} parent=1 // loop_footer
      %s30 = sadd.s32 1, %s26
    $region7: #{tpu_custom_call.1} parent=1 // loop_footer_branch
      %25 = sbr.rel target = $region3
    $region8: #{tpu_custom_call.1} parent=1 // loop_exit
      _
    %1434 = vsyncpa [#allocation3], 1
    %s1435 = scalar_lea.sflag [#allocation3], 1
    %1436 = vsyncpa %s1435, 1

</llo_original>
